<compile_context>
chip_gen: v7x
topology: tpu7x:2x2x1
jax: 0.10.0
libtpu: 0.0.40
codegen_flags: <defaults>
</compile_context>

<pallas_src>
import functools

import numpy as np
import jax
import jax.numpy as jnp
from jax import lax
from jax.experimental import pallas as pl
from jax.experimental.pallas import tpu as pltpu


def _bottleneck_kernel(W, x_ref, xh_ref, w1_ref, w2_ref, w3_ref,
                       b1_ref, b2_ref, b3_ref, ml_ref, mr_ref,
                       o_ref, h1p_ref):
    """One (batch, row-block) tile.

    x_ref  : (1, hb*W, Cin)        bf16  block rows, channels-last flattened
    xh_ref : (1, 1, 2*W, Cin)      bf16  halo rows: [row above | row below]
    w1_ref : (Cin, width)          bf16  1x1 conv, bn1 scale folded in
    w2_ref : (3, 3*width, width)   bf16  3x3 conv, dx taps stacked along K
    w3_ref : (width, Cout)         bf16  1x1 conv, bn3 scale folded in
    b*_ref : (1, C)                f32   folded batch-norm biases
    ml_ref : (L, 1)                f32   0 at image col W-1 (dx=-1 tap) else 1
    mr_ref : (L, 1)                f32   0 at image col 0   (dx=+1 tap) else 1
    o_ref  : (1, hb*W, Cout)       bf16
    h1p_ref: (L, 3*width)          bf16  conv2 staging buffer, L = (hb+2)*W
    """
    hbW = x_ref.shape[1]
    width = w1_ref.shape[1]
    L = hbW + 2 * W

    r = pl.program_id(1)
    last_r = pl.num_programs(1) - 1

    # ---- conv1 (1x1) + bn1 + relu on block rows + one halo image row each side
    xh = xh_ref[0, 0]                                              # (2W, Cin)
    x_ext = jnp.concatenate([xh[:W], x_ref[0], xh[W:]], axis=0)    # (L, Cin) bf16
    h1 = jnp.dot(x_ext, w1_ref[...], preferred_element_type=jnp.float32)
    h1 = jnp.maximum(h1 + b1_ref[...], 0.0)                        # (L, width) f32

    # Halo rows that fall outside the image are conv2's zero padding: zero
    # them *after* conv1+bn1 (a zero input row maps to relu(b1), not 0).
    ridx = lax.broadcasted_iota(jnp.int32, (L, 1), 0)
    valid = ((ridx >= W) | (r > 0)) & ((ridx < W + hbW) | (r < last_r))
    h1 = jnp.where(valid, h1, 0.0)

    # ---- stage conv2 inputs: 3 dx copies, sublane-aligned bf16 stores -------
    # Column block dx holds h1 shifted by dx flattened rows (pltpu.roll on the
    # XLU); all three stores share row offset 0.  The circular wrap row is the
    # column-edge-masked element, so it is already zero.
    h1p_ref[:, width:2 * width] = h1.astype(jnp.bfloat16)                    # dx =  0
    h1p_ref[:, 0:width] = pltpu.roll(h1 * ml_ref[...], shift=1,
                                     axis=0).astype(jnp.bfloat16)            # dx = -1
    h1p_ref[:, 2 * width:] = pltpu.roll(h1 * mr_ref[...], shift=L - 1,
                                        axis=0).astype(jnp.bfloat16)         # dx = +1

    # ---- conv2 (3x3, stride=1, pad=1): 3 matmuls with K = 3*width -----------
    acc = None
    for dy in range(3):
        part = jnp.dot(h1p_ref[dy * W:dy * W + hbW, :], w2_ref[dy],
                       preferred_element_type=jnp.float32)
        acc = part if acc is None else acc + part
    h2 = jnp.maximum(acc + b2_ref[...], 0.0)                       # (hbW, width)

    # ---- conv3 (1x1) + bn3 + residual + relu (f32 accumulate, bf16 store) ---
    h3 = jnp.dot(h2.astype(jnp.bfloat16), w3_ref[...],
                 preferred_element_type=jnp.float32) + b3_ref[...]
    out = jnp.maximum(h3 + x_ref[0].astype(jnp.float32), 0.0)
    o_ref[0] = out.astype(o_ref.dtype)


def _fold_bn(gamma, beta, mean, var, eps=1e-5):
    scale = gamma / jnp.sqrt(var + eps)
    return scale, beta - mean * scale                              # (C,), (C,)


def _pick_row_block(H, W, Cin, Cout, width, vmem_budget=24 << 20):
    """Largest hb dividing H whose per-step working set fits the budget."""
    best = 1
    for hb in range(1, H + 1):
        if H % hb:
            continue
        hbW, L = hb * W, (hb + 2) * W
        est = (2 * 2 * hbW * (Cin + Cout)      # in/out blocks, 2x buffered, bf16
               + 2 * L * 3 * width             # staging scratch, bf16
               + 4 * 4 * L * width)            # f32 live values (h1/rolls/acc/h2)
        if est <= vmem_budget and hbW % 8 == 0:
            best = hb
    return best


def bottleneck_pallas(x_nchw, p, row_block=None):
    """x_nchw: (N, Cin, H, W) float32; p: dict of PyTorch-convention params."""
    N, Cin, H, W = x_nchw.shape
    width = p["conv1_w"].shape[0]
    Cout = p["conv3_w"].shape[0]
    assert Cout == Cin, "default Bottleneck (downsample=None) needs inplanes == planes*4"

    hb = _pick_row_block(H, W, Cin, Cout, width) if row_block is None else row_block
    assert H % hb == 0 and (hb * W) % 8 == 0
    nb = H // hb
    hbW = hb * W
    L = hbW + 2 * W

    # NCHW f32 -> channels-last flattened bf16 activations (glue).
    x_nhwc = jnp.transpose(x_nchw, (0, 2, 3, 1)).astype(jnp.bfloat16)
    x_flat = x_nhwc.reshape(N, H * W, Cin)

    # One image row above / below each row block (zeros at the image edges);
    # conv1 is recomputed on these 2 rows per block inside the kernel (glue).
    zrow = jnp.zeros((N, 1, W, Cin), jnp.bfloat16)
    above = jnp.concatenate([zrow, x_nhwc[:, hb - 1::hb][:, :nb - 1]], axis=1)
    below = jnp.concatenate([x_nhwc[:, hb::hb], zrow], axis=1)
    x_halo = jnp.stack([above, below], axis=2).reshape(N, nb, 2 * W, Cin)

    # Fold the BN scale into the conv output channels; biases stay additive.
    s1, b1 = _fold_bn(p["bn1_g"], p["bn1_b"], p["bn1_m"], p["bn1_v"])
    s2, b2 = _fold_bn(p["bn2_g"], p["bn2_b"], p["bn2_m"], p["bn2_v"])
    s3, b3 = _fold_bn(p["bn3_g"], p["bn3_b"], p["bn3_m"], p["bn3_v"])

    # PyTorch OIHW conv weights -> matmul layout, bf16 MXU operands (glue).
    w1 = (jnp.transpose(p["conv1_w"][:, :, 0, 0]) * s1[None, :]).astype(jnp.bfloat16)
    w2c = p["conv2_w"]                                             # (O, I, 3, 3)
    w2 = jnp.stack(
        [jnp.concatenate([jnp.transpose(w2c[:, :, dy, dx]) for dx in range(3)],
                         axis=0) for dy in range(3)], axis=0)      # (3, 3*width, width)
    w2 = (w2 * s2[None, None, :]).astype(jnp.bfloat16)
    w3 = (jnp.transpose(p["conv3_w"][:, :, 0, 0]) * s3[None, :]).astype(jnp.bfloat16)

    b1 = b1[None, :].astype(jnp.float32)
    b2 = b2[None, :].astype(jnp.float32)
    b3 = b3[None, :].astype(jnp.float32)

    # Column-edge masks in the extended (halo-included) flattened row space.
    col = np.arange(L) % W
    maskl = jnp.asarray((col != W - 1).astype(np.float32).reshape(L, 1))
    maskr = jnp.asarray((col != 0).astype(np.float32).reshape(L, 1))

    kernel = functools.partial(_bottleneck_kernel, W)

    flops = 2 * N * H * W * (Cin * width + 9 * width * width + width * Cout)
    bytes_accessed = (2 * (x_flat.size + x_halo.size + N * H * W * Cout
                           + w1.size + w2.size + w3.size)
                      + 4 * (b1.size + b2.size + b3.size + 2 * L))

    try:  # size the scoped-VMEM limit off the physical capacity when queryable
        vmem_limit = min(48 * 1024 * 1024,
                         int(pltpu.get_tpu_info().vmem_capacity_bytes * 3 // 4))
    except Exception:
        vmem_limit = 48 * 1024 * 1024

    out_flat = pl.pallas_call(
        kernel,
        out_shape=jax.ShapeDtypeStruct((N, H * W, Cout), jnp.bfloat16),
        grid=(N, nb),
        in_specs=[
            pl.BlockSpec((1, hbW, Cin), lambda n, r: (n, r, 0)),
            pl.BlockSpec((1, 1, 2 * W, Cin), lambda n, r: (n, r, 0, 0)),
            pl.BlockSpec((Cin, width), lambda n, r: (0, 0)),
            pl.BlockSpec((3, 3 * width, width), lambda n, r: (0, 0, 0)),
            pl.BlockSpec((width, Cout), lambda n, r: (0, 0)),
            pl.BlockSpec((1, width), lambda n, r: (0, 0)),
            pl.BlockSpec((1, width), lambda n, r: (0, 0)),
            pl.BlockSpec((1, Cout), lambda n, r: (0, 0)),
            pl.BlockSpec((L, 1), lambda n, r: (0, 0)),
            pl.BlockSpec((L, 1), lambda n, r: (0, 0)),
        ],
        out_specs=pl.BlockSpec((1, hbW, Cout), lambda n, r: (n, r, 0)),
        scratch_shapes=[pltpu.VMEM((L, 3 * width), jnp.bfloat16)],
        compiler_params=pltpu.CompilerParams(
            dimension_semantics=("parallel", "parallel"),
            vmem_limit_bytes=vmem_limit),
        cost_estimate=pl.CostEstimate(
            flops=flops, transcendentals=0, bytes_accessed=bytes_accessed),
    )(x_flat, x_halo, w1, w2, w3, b1, b2, b3, maskl, maskr)

    # (N, H*W, Cout) bf16 -> NCHW f32 (glue).
    return jnp.transpose(out_flat.reshape(N, H, W, Cout).astype(jnp.float32),
                         (0, 3, 1, 2))


def bottleneck_reference(x, p, eps=1e-5):
    """Pure-JAX NCHW reference mirroring the PyTorch forward (eval-mode BN)."""
    dn = ("NCHW", "OIHW", "NCHW")

    def bn(h, g, b, m, v):
        g, b, m, v = (a[None, :, None, None] for a in (g, b, m, v))
        return (h - m) / jnp.sqrt(v + eps) * g + b

    shortcut = x
    h = lax.conv_general_dilated(x, p["conv1_w"], (1, 1), "VALID",
                                 dimension_numbers=dn)
    h = jax.nn.relu(bn(h, p["bn1_g"], p["bn1_b"], p["bn1_m"], p["bn1_v"]))
    h = lax.conv_general_dilated(h, p["conv2_w"], (1, 1), ((1, 1), (1, 1)),
                                 dimension_numbers=dn)
    h = jax.nn.relu(bn(h, p["bn2_g"], p["bn2_b"], p["bn2_m"], p["bn2_v"]))
    h = lax.conv_general_dilated(h, p["conv3_w"], (1, 1), "VALID",
                                 dimension_numbers=dn)
    h = bn(h, p["bn3_g"], p["bn3_b"], p["bn3_m"], p["bn3_v"])
    return jax.nn.relu(h + shortcut)


def make_params(key, inplanes, planes):
    """Deterministic synthetic parameters in PyTorch shape convention."""
    expansion = 4
    width = planes                      # base_width=64, cardinality=1
    outplanes = planes * expansion
    ks = jax.random.split(key, 6)

    def conv_w(k, cout, cin, kh, kw):
        fan_in = cin * kh * kw
        return jax.random.normal(k, (cout, cin, kh, kw), jnp.float32) * np.sqrt(2.0 / fan_in)

    def bn_params(k, c):
        k1, k2, k3, k4 = jax.random.split(k, 4)
        return dict(
            g=jax.random.uniform(k1, (c,), jnp.float32, 0.8, 1.2),
            b=jax.random.normal(k2, (c,), jnp.float32) * 0.05,
            m=jax.random.normal(k3, (c,), jnp.float32) * 0.05,
            v=jax.random.uniform(k4, (c,), jnp.float32, 0.8, 1.2),
        )

    bn1, bn2, bn3 = bn_params(ks[3], width), bn_params(ks[4], width), bn_params(ks[5], outplanes)
    return dict(
        conv1_w=conv_w(ks[0], width, inplanes, 1, 1),
        conv2_w=conv_w(ks[1], width, width, 3, 3),
        conv3_w=conv_w(ks[2], outplanes, width, 1, 1),
        bn1_g=bn1["g"], bn1_b=bn1["b"], bn1_m=bn1["m"], bn1_v=bn1["v"],
        bn2_g=bn2["g"], bn2_b=bn2["b"], bn2_m=bn2["m"], bn2_v=bn2["v"],
        bn3_g=bn3["g"], bn3_b=bn3["b"], bn3_m=bn3["m"], bn3_v=bn3["v"],
    )


if __name__ == "__main__":
    # Bottleneck(inplanes=128, planes=32) -> width=32, outplanes=128 == inplanes,
    # so the identity shortcut is valid (downsample=None).  Cout=128 keeps the
    # output store lane-dense; row_block=4 exercises top-edge, interior and
    # bottom-edge halo blocks (nb=4).
    N, inplanes, planes, H, W = 2, 128, 32, 16, 16

    key = jax.random.PRNGKey(0)
    kx, kp = jax.random.split(key)
    x = jax.random.normal(kx, (N, inplanes, H, W), jnp.float32)
    params = make_params(kp, inplanes, planes)

    out = jax.block_until_ready(bottleneck_pallas(x, params, row_block=4))
    ref = jax.block_until_ready(bottleneck_reference(x, params))

    # bf16 activations / MXU operands (f32 accumulation) -> loose tolerance;
    # structural bugs would produce O(1) errors.
    np.testing.assert_allclose(np.asarray(out), np.asarray(ref),
                               rtol=5e-2, atol=1.5e-1)

    print("KERNEL_OK")
</pallas_src>

<mosaic_0001>
module attributes {stable_mosaic.version = 11 : i64} {
  func.func @_bottleneck_kernel(%arg0: i32, %arg1: i32, %arg2: memref<1x64x128xbf16, #tpu.memory_space<vmem>>, %arg3: memref<1x1x32x128xbf16, #tpu.memory_space<vmem>>, %arg4: memref<128x32xbf16, #tpu.memory_space<vmem>>, %arg5: memref<3x96x32xbf16, #tpu.memory_space<vmem>>, %arg6: memref<32x128xbf16, #tpu.memory_space<vmem>>, %arg7: memref<1x32xf32, #tpu.memory_space<vmem>>, %arg8: memref<1x32xf32, #tpu.memory_space<vmem>>, %arg9: memref<1x128xf32, #tpu.memory_space<vmem>>, %arg10: memref<96x1xf32, #tpu.memory_space<vmem>>, %arg11: memref<96x1xf32, #tpu.memory_space<vmem>>, %arg12: memref<1x64x128xbf16, #tpu.memory_space<vmem>>, %arg13: memref<96x96xbf16, #tpu.memory_space<vmem>>) attributes {dimension_semantics = [#tpu.dimension_semantics<parallel>, #tpu.dimension_semantics<parallel>], iteration_bounds = array<i64: 2, 4>, scalar_prefetch = 0 : i64, scratch_operands = 1 : i64, tpu.core_type = #tpu.core_type<tc>, window_params = [{transform_indices = @transform_0, window_bounds = array<i64: 1, 64, 128>}, {transform_indices = @transform_1, window_bounds = array<i64: 1, 1, 32, 128>}, {pipeline_mode = #tpu.pipeline_mode<synchronous>, transform_indices = @transform_2, window_bounds = array<i64: 128, 32>}, {pipeline_mode = #tpu.pipeline_mode<synchronous>, transform_indices = @transform_3, window_bounds = array<i64: 3, 96, 32>}, {pipeline_mode = #tpu.pipeline_mode<synchronous>, transform_indices = @transform_4, window_bounds = array<i64: 32, 128>}, {pipeline_mode = #tpu.pipeline_mode<synchronous>, transform_indices = @transform_5, window_bounds = array<i64: 1, 32>}, {pipeline_mode = #tpu.pipeline_mode<synchronous>, transform_indices = @transform_6, window_bounds = array<i64: 1, 32>}, {pipeline_mode = #tpu.pipeline_mode<synchronous>, transform_indices = @transform_7, window_bounds = array<i64: 1, 128>}, {pipeline_mode = #tpu.pipeline_mode<synchronous>, transform_indices = @transform_8, window_bounds = array<i64: 96, 1>}, {pipeline_mode = #tpu.pipeline_mode<synchronous>, transform_indices = @transform_9, window_bounds = array<i64: 96, 1>}, {transform_indices = @transform_10, window_bounds = array<i64: 1, 64, 128>}]} {
    %c0 = arith.constant 0 : index
    %c0_0 = arith.constant 0 : index
    %c0_1 = arith.constant 0 : index
    %c0_2 = arith.constant 0 : index
    %0 = vector.load %arg3[%c0, %c0_0, %c0_1, %c0_2] : memref<1x1x32x128xbf16, #tpu.memory_space<vmem>>, vector<1x1x32x128xbf16>
    %1 = vector.shape_cast %0 : vector<1x1x32x128xbf16> to vector<32x128xbf16>
    %2 = vector.extract_strided_slice %1 {offsets = [0, 0], sizes = [16, 128], strides = [1, 1]} : vector<32x128xbf16> to vector<16x128xbf16>
    %c0_3 = arith.constant 0 : index
    %c0_4 = arith.constant 0 : index
    %c0_5 = arith.constant 0 : index
    %3 = vector.load %arg2[%c0_3, %c0_4, %c0_5] : memref<1x64x128xbf16, #tpu.memory_space<vmem>>, vector<1x64x128xbf16>
    %4 = vector.shape_cast %3 : vector<1x64x128xbf16> to vector<64x128xbf16>
    %5 = vector.extract_strided_slice %1 {offsets = [16, 0], sizes = [16, 128], strides = [1, 1]} : vector<32x128xbf16> to vector<16x128xbf16>
    %6 = tpu.concatenate %2, %4, %5 in 0 : vector<16x128xbf16>, vector<64x128xbf16>, vector<16x128xbf16> -> vector<96x128xbf16>
    %c0_6 = arith.constant 0 : index
    %c0_7 = arith.constant 0 : index
    %7 = vector.load %arg4[%c0_6, %c0_7] : memref<128x32xbf16, #tpu.memory_space<vmem>>, vector<128x32xbf16>
    %cst = arith.constant dense<0.000000e+00> : vector<96x32xf32>
    %8 = tpu.matmul %6, %7, %cst {dimension_numbers = #tpu.dot_dimension_numbers<[1], [0], [0], [1], [0, 0, 1, 1], [], []>} : vector<96x128xbf16>, vector<128x32xbf16>, vector<96x32xf32> -> vector<96x32xf32>
    %c0_8 = arith.constant 0 : index
    %c0_9 = arith.constant 0 : index
    %9 = vector.load %arg7[%c0_8, %c0_9] : memref<1x32xf32, #tpu.memory_space<vmem>>, vector<1x32xf32>
    %10 = vector.broadcast %9 : vector<1x32xf32> to vector<96x32xf32>
    %11 = arith.addf %8, %10 : vector<96x32xf32>
    %cst_10 = arith.constant 0.000000e+00 : f32
    %12 = vector.broadcast %cst_10 : f32 to vector<96x32xf32>
    %13 = arith.maximumf %11, %12 : vector<96x32xf32>
    %14 = tpu.iota {dimensions = array<i32: 0>} : vector<96x1xi32>
    %c16_i32 = arith.constant 16 : i32
    %15 = vector.broadcast %c16_i32 : i32 to vector<96x1xi32>
    %16 = arith.cmpi sge, %14, %15 : vector<96x1xi32>
    %c0_i32 = arith.constant 0 : i32
    %17 = arith.cmpi sgt, %arg1, %c0_i32 : i32
    %18 = vector.broadcast %17 : i1 to vector<96x1xi1>
    %19 = arith.ori %16, %18 : vector<96x1xi1>
    %c80_i32 = arith.constant 80 : i32
    %20 = vector.broadcast %c80_i32 : i32 to vector<96x1xi32>
    %21 = arith.cmpi slt, %14, %20 : vector<96x1xi32>
    %c3_i32 = arith.constant 3 : i32
    %22 = arith.cmpi slt, %arg1, %c3_i32 : i32
    %23 = vector.broadcast %22 : i1 to vector<96x1xi1>
    %24 = arith.ori %21, %23 : vector<96x1xi1>
    %25 = arith.andi %19, %24 : vector<96x1xi1>
    %cst_11 = arith.constant 0.000000e+00 : f32
    %26 = vector.shape_cast %25 : vector<96x1xi1> to vector<96x1xi1>
    %27 = vector.broadcast %26 : vector<96x1xi1> to vector<96x32xi1>
    %28 = vector.broadcast %cst_11 : f32 to vector<96x32xf32>
    %29 = arith.select %27, %13, %28 : vector<96x32xi1>, vector<96x32xf32>
    %30 = arith.truncf %29 : vector<96x32xf32> to vector<96x32xbf16>
    %c0_12 = arith.constant 0 : index
    %c32 = arith.constant 32 : index
    %31 = vector.load %arg13[%c0_12, %c32] : memref<96x96xbf16, #tpu.memory_space<vmem>>, vector<96x32xbf16>
    tpu.vector_store %arg13[%c0_12, %c32], %30 {strides = array<i32>} : memref<96x96xbf16, #tpu.memory_space<vmem>>, vector<96x32xbf16>,
    %c0_13 = arith.constant 0 : index
    %c0_14 = arith.constant 0 : index
    %32 = vector.load %arg10[%c0_13, %c0_14] : memref<96x1xf32, #tpu.memory_space<vmem>>, vector<96x1xf32>
    %33 = vector.broadcast %32 : vector<96x1xf32> to vector<96x32xf32>
    %34 = arith.mulf %29, %33 : vector<96x32xf32>
    %c1_i32 = arith.constant 1 : i32
    %35 = tpu.dynamic_rotate %34 by %c1_i32 dim 0 : vector<96x32xf32>, i32 -> vector<96x32xf32>
    %36 = arith.truncf %35 : vector<96x32xf32> to vector<96x32xbf16>
    %c0_15 = arith.constant 0 : index
    %c0_16 = arith.constant 0 : index
    %37 = vector.load %arg13[%c0_15, %c0_16] : memref<96x96xbf16, #tpu.memory_space<vmem>>, vector<96x32xbf16>
    tpu.vector_store %arg13[%c0_15, %c0_16], %36 {strides = array<i32>} : memref<96x96xbf16, #tpu.memory_space<vmem>>, vector<96x32xbf16>,
    %c0_17 = arith.constant 0 : index
    %c0_18 = arith.constant 0 : index
    %38 = vector.load %arg11[%c0_17, %c0_18] : memref<96x1xf32, #tpu.memory_space<vmem>>, vector<96x1xf32>
    %39 = vector.broadcast %38 : vector<96x1xf32> to vector<96x32xf32>
    %40 = arith.mulf %29, %39 : vector<96x32xf32>
    %c95_i32 = arith.constant 95 : i32
    %41 = tpu.dynamic_rotate %40 by %c95_i32 dim 0 : vector<96x32xf32>, i32 -> vector<96x32xf32>
    %42 = arith.truncf %41 : vector<96x32xf32> to vector<96x32xbf16>
    %c0_19 = arith.constant 0 : index
    %c64 = arith.constant 64 : index
    %43 = vector.load %arg13[%c0_19, %c64] : memref<96x96xbf16, #tpu.memory_space<vmem>>, vector<96x32xbf16>
    tpu.vector_store %arg13[%c0_19, %c64], %42 {strides = array<i32>} : memref<96x96xbf16, #tpu.memory_space<vmem>>, vector<96x32xbf16>,
    %c0_20 = arith.constant 0 : index
    %c0_21 = arith.constant 0 : index
    %44 = vector.load %arg13[%c0_20, %c0_21] : memref<96x96xbf16, #tpu.memory_space<vmem>>, vector<64x96xbf16>
    %c0_22 = arith.constant 0 : index
    %c0_23 = arith.constant 0 : index
    %c0_24 = arith.constant 0 : index
    %45 = vector.load %arg5[%c0_22, %c0_23, %c0_24] : memref<3x96x32xbf16, #tpu.memory_space<vmem>>, vector<1x96x32xbf16>
    %46 = vector.shape_cast %45 : vector<1x96x32xbf16> to vector<96x32xbf16>
    %cst_25 = arith.constant dense<0.000000e+00> : vector<64x32xf32>
    %47 = tpu.matmul %44, %46, %cst_25 {dimension_numbers = #tpu.dot_dimension_numbers<[1], [0], [0], [1], [0, 0, 1, 1], [], []>} : vector<64x96xbf16>, vector<96x32xbf16>, vector<64x32xf32> -> vector<64x32xf32>
    %c16 = arith.constant 16 : index
    %c0_26 = arith.constant 0 : index
    %48 = vector.load %arg13[%c16, %c0_26] : memref<96x96xbf16, #tpu.memory_space<vmem>>, vector<64x96xbf16>
    %c1 = arith.constant 1 : index
    %c0_27 = arith.constant 0 : index
    %c0_28 = arith.constant 0 : index
    %49 = vector.load %arg5[%c1, %c0_27, %c0_28] : memref<3x96x32xbf16, #tpu.memory_space<vmem>>, vector<1x96x32xbf16>
    %50 = vector.shape_cast %49 : vector<1x96x32xbf16> to vector<96x32xbf16>
    %cst_29 = arith.constant dense<0.000000e+00> : vector<64x32xf32>
    %51 = tpu.matmul %48, %50, %cst_29 {dimension_numbers = #tpu.dot_dimension_numbers<[1], [0], [0], [1], [0, 0, 1, 1], [], []>} : vector<64x96xbf16>, vector<96x32xbf16>, vector<64x32xf32> -> vector<64x32xf32>
    %52 = arith.addf %47, %51 : vector<64x32xf32>
    %c32_30 = arith.constant 32 : index
    %c0_31 = arith.constant 0 : index
    %53 = vector.load %arg13[%c32_30, %c0_31] : memref<96x96xbf16, #tpu.memory_space<vmem>>, vector<64x96xbf16>
    %c2 = arith.constant 2 : index
    %c0_32 = arith.constant 0 : index
    %c0_33 = arith.constant 0 : index
    %54 = vector.load %arg5[%c2, %c0_32, %c0_33] : memref<3x96x32xbf16, #tpu.memory_space<vmem>>, vector<1x96x32xbf16>
    %55 = vector.shape_cast %54 : vector<1x96x32xbf16> to vector<96x32xbf16>
    %cst_34 = arith.constant dense<0.000000e+00> : vector<64x32xf32>
    %56 = tpu.matmul %53, %55, %cst_34 {dimension_numbers = #tpu.dot_dimension_numbers<[1], [0], [0], [1], [0, 0, 1, 1], [], []>} : vector<64x96xbf16>, vector<96x32xbf16>, vector<64x32xf32> -> vector<64x32xf32>
    %57 = arith.addf %52, %56 : vector<64x32xf32>
    %c0_35 = arith.constant 0 : index
    %c0_36 = arith.constant 0 : index
    %58 = vector.load %arg8[%c0_35, %c0_36] : memref<1x32xf32, #tpu.memory_space<vmem>>, vector<1x32xf32>
    %59 = vector.broadcast %58 : vector<1x32xf32> to vector<64x32xf32>
    %60 = arith.addf %57, %59 : vector<64x32xf32>
    %cst_37 = arith.constant 0.000000e+00 : f32
    %61 = vector.broadcast %cst_37 : f32 to vector<64x32xf32>
    %62 = arith.maximumf %60, %61 : vector<64x32xf32>
    %63 = arith.truncf %62 : vector<64x32xf32> to vector<64x32xbf16>
    %c0_38 = arith.constant 0 : index
    %c0_39 = arith.constant 0 : index
    %64 = vector.load %arg6[%c0_38, %c0_39] : memref<32x128xbf16, #tpu.memory_space<vmem>>, vector<32x128xbf16>
    %cst_40 = arith.constant dense<0.000000e+00> : vector<64x128xf32>
    %65 = tpu.matmul %63, %64, %cst_40 {dimension_numbers = #tpu.dot_dimension_numbers<[1], [0], [0], [1], [0, 0, 1, 1], [], []>} : vector<64x32xbf16>, vector<32x128xbf16>, vector<64x128xf32> -> vector<64x128xf32>
    %c0_41 = arith.constant 0 : index
    %c0_42 = arith.constant 0 : index
    %66 = vector.load %arg9[%c0_41, %c0_42] : memref<1x128xf32, #tpu.memory_space<vmem>>, vector<1x128xf32>
    %67 = vector.broadcast %66 : vector<1x128xf32> to vector<64x128xf32>
    %68 = arith.addf %65, %67 : vector<64x128xf32>
    %c0_43 = arith.constant 0 : index
    %c0_44 = arith.constant 0 : index
    %c0_45 = arith.constant 0 : index
    %69 = vector.load %arg2[%c0_43, %c0_44, %c0_45] : memref<1x64x128xbf16, #tpu.memory_space<vmem>>, vector<1x64x128xbf16>
    %70 = vector.shape_cast %69 : vector<1x64x128xbf16> to vector<64x128xbf16>
    %71 = arith.extf %70 : vector<64x128xbf16> to vector<64x128xf32>
    %72 = arith.addf %68, %71 : vector<64x128xf32>
    %cst_46 = arith.constant 0.000000e+00 : f32
    %73 = vector.broadcast %cst_46 : f32 to vector<64x128xf32>
    %74 = arith.maximumf %72, %73 : vector<64x128xf32>
    %75 = arith.truncf %74 : vector<64x128xf32> to vector<64x128xbf16>
    %c0_47 = arith.constant 0 : index
    %c0_48 = arith.constant 0 : index
    %c0_49 = arith.constant 0 : index
    %76 = vector.load %arg12[%c0_47, %c0_48, %c0_49] : memref<1x64x128xbf16, #tpu.memory_space<vmem>>, vector<1x64x128xbf16>
    %77 = vector.shape_cast %76 : vector<1x64x128xbf16> to vector<64x128xbf16>
    %78 = vector.shape_cast %75 : vector<64x128xbf16> to vector<1x64x128xbf16>
    tpu.vector_store %arg12[%c0_47, %c0_48, %c0_49], %78 {strides = array<i32>} : memref<1x64x128xbf16, #tpu.memory_space<vmem>>, vector<1x64x128xbf16>,
    return
  }
  func.func @transform_0(%arg0: i32, %arg1: i32) -> (i32, i32, i32) {
    %c0_i32 = arith.constant 0 : i32
    %c0_i32_0 = arith.constant 0 : i32
    return %arg0, %arg1, %c0_i32 : i32, i32, i32
  }
  func.func @transform_1(%arg0: i32, %arg1: i32) -> (i32, i32, i32, i32) {
    %c0_i32 = arith.constant 0 : i32
    %c0_i32_0 = arith.constant 0 : i32
    %c0_i32_1 = arith.constant 0 : i32
    return %arg0, %arg1, %c0_i32, %c0_i32_0 : i32, i32, i32, i32
  }
  func.func @transform_2(%arg0: i32, %arg1: i32) -> (i32, i32) {
    %c0_i32 = arith.constant 0 : i32
    %c0_i32_0 = arith.constant 0 : i32
    %c0_i32_1 = arith.constant 0 : i32
    return %c0_i32, %c0_i32_0 : i32, i32
  }
  func.func @transform_3(%arg0: i32, %arg1: i32) -> (i32, i32, i32) {
    %c0_i32 = arith.constant 0 : i32
    %c0_i32_0 = arith.constant 0 : i32
    %c0_i32_1 = arith.constant 0 : i32
    %c0_i32_2 = arith.constant 0 : i32
    return %c0_i32, %c0_i32_0, %c0_i32_1 : i32, i32, i32
  }
  func.func @transform_4(%arg0: i32, %arg1: i32) -> (i32, i32) {
    %c0_i32 = arith.constant 0 : i32
    %c0_i32_0 = arith.constant 0 : i32
    %c0_i32_1 = arith.constant 0 : i32
    return %c0_i32, %c0_i32_0 : i32, i32
  }
  func.func @transform_5(%arg0: i32, %arg1: i32) -> (i32, i32) {
    %c0_i32 = arith.constant 0 : i32
    %c0_i32_0 = arith.constant 0 : i32
    %c0_i32_1 = arith.constant 0 : i32
    return %c0_i32, %c0_i32_0 : i32, i32
  }
  func.func @transform_6(%arg0: i32, %arg1: i32) -> (i32, i32) {
    %c0_i32 = arith.constant 0 : i32
    %c0_i32_0 = arith.constant 0 : i32
    %c0_i32_1 = arith.constant 0 : i32
    return %c0_i32, %c0_i32_0 : i32, i32
  }
  func.func @transform_7(%arg0: i32, %arg1: i32) -> (i32, i32) {
    %c0_i32 = arith.constant 0 : i32
    %c0_i32_0 = arith.constant 0 : i32
    %c0_i32_1 = arith.constant 0 : i32
    return %c0_i32, %c0_i32_0 : i32, i32
  }
  func.func @transform_8(%arg0: i32, %arg1: i32) -> (i32, i32) {
    %c0_i32 = arith.constant 0 : i32
    %c0_i32_0 = arith.constant 0 : i32
    %c0_i32_1 = arith.constant 0 : i32
    return %c0_i32, %c0_i32_0 : i32, i32
  }
  func.func @transform_9(%arg0: i32, %arg1: i32) -> (i32, i32) {
    %c0_i32 = arith.constant 0 : i32
    %c0_i32_0 = arith.constant 0 : i32
    %c0_i32_1 = arith.constant 0 : i32
    return %c0_i32, %c0_i32_0 : i32, i32
  }
  func.func @transform_10(%arg0: i32, %arg1: i32) -> (i32, i32, i32) {
    %c0_i32 = arith.constant 0 : i32
    %c0_i32_0 = arith.constant 0 : i32
    return %arg0, %arg1, %c0_i32 : i32, i32, i32
  }
}

</mosaic_0001>

<llo_original>
// kernel: tpu_custom_call.1
$region0: #{tpu_custom_call.1}
  #allocation0 [shape = 'u32[]', space=smem, size = 0x4, offset = 0x4, fixed_abs, tag = 'smem constant byte address 0x4 - core index']
  #allocation1 [shape = 'u32[144,128]{1,0:T(1,128)}', space=vmem, size = 0x12000, scoped, tag = 'internal scratch']
  #allocation2 [shape = 'bf16[96,96]{1,0:T(16,128)(2,1)}', space=vmem, size = 0x6000, scoped, tag = 'scratch operand']
  %s0 = inlined_call_operand.vmem [shape: bf16[2,256,128], index: 0, kind: input, shape index: {}]
  %s1 = inlined_call_operand.vmem [shape: bf16[2,4,32,128], index: 1, kind: input, shape index: {}]
  %s2 = inlined_call_operand.vmem [shape: bf16[128,32], index: 2, kind: input, shape index: {}]
  %s3 = inlined_call_operand.vmem [shape: bf16[3,96,32], index: 3, kind: input, shape index: {}]
  %s4 = inlined_call_operand.vmem [shape: bf16[32,128], index: 4, kind: input, shape index: {}]
  %s5 = inlined_call_operand.vmem [shape: f32[1,32], index: 5, kind: input, shape index: {}]
  %s6 = inlined_call_operand.vmem [shape: f32[1,32], index: 6, kind: input, shape index: {}]
  %s7 = inlined_call_operand.vmem [shape: f32[1,128], index: 7, kind: input, shape index: {}]
  %s8 = inlined_call_operand.vmem [shape: f32[96,1], index: 8, kind: input, shape index: {}]
  %s9 = inlined_call_operand.vmem [shape: f32[96,1], index: 9, kind: input, shape index: {}]
  %s10 = inlined_call_operand.hbm [shape: bf16[2,256,128], index: 10, kind: output, shape index: {}]
  %s11 = sld [smem:[#allocation0]]
  $region73: #{tpu_custom_call.1} parent=0
    _
  %s13 = ssub.s32 1, %s11
  %s14 = scalar_select 0, %s13, %s11
  $region1: #{tpu_custom_call.1} parent=0
    #allocation3 [shape = 'u8[32768]{0}', space=vmem, size = 0x8000, scoped, tag = 'output window, operand 0']
    #allocation4 [shape = 's32[2]{0}', space=sflag, size = 0x8, scoped, tag = 'scoped memory for tpu_custom_call.1']
    %15 = vsyncpa [#allocation4], 0
    %s16 = scalar_lea.sflag [#allocation4], 1
    %17 = vsyncpa %s16, 0
    loop: start=0, step=1, limit=10
    $region2: #{tpu_custom_call.1} parent=1 // loop_pre_header
      _
    $region3: #{tpu_custom_call.1} parent=1 // loop_header
      %s19 = sphi 0, %s23
      %p20 = scmp.ge.s32.totalorder %s19, 10
      %s26 = sphi 0, %s38
      %s27 = sphi 0, %s34
      %s28 = sphi 0, %s26
      %s29 = sphi 0, %s27
      %s30 = sphi 0, %s28
      %s31 = sphi 0, %s29
      %s43 = sphi 0, %s45
      %s46 = sphi 0, %s43
      %s47 = sphi 0, %s46
      %s63 = sphi 0, %s47
      %s71 = sphi 0, %s73
      %s74 = sphi 0, %s71
      %s75 = sphi 0, %s74
      %s91 = sphi 0, %s75
      %s95 = sphi 0, %s95
      %s97 = sphi 0, %s95
      %s98 = sphi 0, %s97
      %s112 = sphi 0, %s98
      %s116 = sphi 0, %s116
      %s118 = sphi 0, %s116
      %s119 = sphi 0, %s118
      %s133 = sphi 0, %s119
      %s137 = sphi 0, %s137
      %s139 = sphi 0, %s137
      %s140 = sphi 0, %s139
      %s154 = sphi 0, %s140
      %s158 = sphi 0, %s158
      %s160 = sphi 0, %s158
      %s161 = sphi 0, %s160
      %s175 = sphi 0, %s161
      %s179 = sphi 0, %s179
      %s181 = sphi 0, %s179
      %s182 = sphi 0, %s181
      %s196 = sphi 0, %s182
      %s200 = sphi 0, %s200
      %s202 = sphi 0, %s200
      %s203 = sphi 0, %s202
      %s217 = sphi 0, %s203
      %s221 = sphi 0, %s221
      %s223 = sphi 0, %s221
      %s224 = sphi 0, %s223
      %s238 = sphi 0, %s224
      %s242 = sphi 0, %s242
      %s244 = sphi 0, %s242
      %s245 = sphi 0, %s244
      %s259 = sphi 0, %s245
      %s267 = sphi 0, %s269
      %s270 = sphi 0, %s267
      %s271 = sphi 0, %s270
      %s287 = sphi 0, %s271
    $region4: #{tpu_custom_call.1} parent=1 // loop_header_branch
      %22 = sbr.rel (%p20) target = $region8
    $region5: #{tpu_custom_call.1} parent=1 // loop_body
      %s24 = ssub.s32 %s19, 1
      %s25 = ssub.s32 %s19, 2
      %s32 = sadd.s32 1, %s27
      %p33 = scmp.ge.s32.totalorder %s32, 4
      %s34 = scalar_select %p33, 0, %s32
      %s35 = sadd.s32 1, %s26
      %s36 = scalar_select %p33, %s35, %s26
      %p37 = scmp.ge.s32.totalorder %s36, 2
      %s38 = scalar_select %p37, 0, %s36
      %s39 = ssub.s32 %s26, %s38
      %s40 = ssub.s32 %s27, %s34
      %s41 = sor.u32 %s39, %s40
      %p42 = scmp.eq.s32.totalorder %s41, 0
      %s44 = sadd.s32 %s43, 1
      %s45 = scalar_select %p42, %s43, %s44
      %p48 = pneg %p42
      %p49 = scmp.eq.s32.totalorder %s19, 7
      %p50 = por %p48, %p49
      %p51 = scmp.ne.s32.totalorder %s43, %s46
      %p52 = scmp.eq.s32.totalorder %s19, 0
      %p53 = por %p51, %p52
      %p54 = scmp.ne.s32.totalorder %s43, %s46
      %p55 = scmp.eq.s32.totalorder %s24, 7
      %p56 = por %p54, %p55
      %p57 = scmp.ne.s32.totalorder %s46, %s47
      %p58 = scmp.eq.s32.totalorder %s24, 0
      %p59 = por %p57, %p58
      %p60 = scmp.ne.s32.totalorder %s46, %s47
      %p61 = scmp.eq.s32.totalorder %s25, 7
      %p62 = por %p60, %p61
      %p64 = scmp.ne.s32.totalorder %s47, %s63
      %p65 = scmp.eq.s32.totalorder %s25, 0
      %p66 = por %p64, %p65
      %s67 = ssub.s32 %s26, %s38
      %s68 = ssub.s32 %s27, %s34
      %s69 = sor.u32 %s67, %s68
      %p70 = scmp.eq.s32.totalorder %s69, 0
      %s72 = sadd.s32 %s71, 1
      %s73 = scalar_select %p70, %s71, %s72
      %p76 = pneg %p70
      %p77 = scmp.eq.s32.totalorder %s19, 7
      %p78 = por %p76, %p77
      %p79 = scmp.ne.s32.totalorder %s71, %s74
      %p80 = scmp.eq.s32.totalorder %s19, 0
      %p81 = por %p79, %p80
      %p82 = scmp.ne.s32.totalorder %s71, %s74
      %p83 = scmp.eq.s32.totalorder %s24, 7
      %p84 = por %p82, %p83
      %p85 = scmp.ne.s32.totalorder %s74, %s75
      %p86 = scmp.eq.s32.totalorder %s24, 0
      %p87 = por %p85, %p86
      %p88 = scmp.ne.s32.totalorder %s74, %s75
      %p89 = scmp.eq.s32.totalorder %s25, 7
      %p90 = por %p88, %p89
      %p92 = scmp.ne.s32.totalorder %s75, %s91
      %p93 = scmp.eq.s32.totalorder %s25, 0
      %p94 = por %p92, %p93
      %s96 = sadd.s32 %s95, 1
      %p99 = scmp.eq.s32.totalorder %s19, 7
      %p100 = scmp.ne.s32.totalorder %s95, %s97
      %p101 = scmp.eq.s32.totalorder %s19, 0
      %p102 = por %p100, %p101
      %p103 = scmp.ne.s32.totalorder %s95, %s97
      %p104 = scmp.eq.s32.totalorder %s24, 7
      %p105 = por %p103, %p104
      %p106 = scmp.ne.s32.totalorder %s97, %s98
      %p107 = scmp.eq.s32.totalorder %s24, 0
      %p108 = por %p106, %p107
      %p109 = scmp.ne.s32.totalorder %s97, %s98
      %p110 = scmp.eq.s32.totalorder %s25, 7
      %p111 = por %p109, %p110
      %p113 = scmp.ne.s32.totalorder %s98, %s112
      %p114 = scmp.eq.s32.totalorder %s25, 0
      %p115 = por %p113, %p114
      %s117 = sadd.s32 %s116, 1
      %p120 = scmp.eq.s32.totalorder %s19, 7
      %p121 = scmp.ne.s32.totalorder %s116, %s118
      %p122 = scmp.eq.s32.totalorder %s19, 0
      %p123 = por %p121, %p122
      %p124 = scmp.ne.s32.totalorder %s116, %s118
      %p125 = scmp.eq.s32.totalorder %s24, 7
      %p126 = por %p124, %p125
      %p127 = scmp.ne.s32.totalorder %s118, %s119
      %p128 = scmp.eq.s32.totalorder %s24, 0
      %p129 = por %p127, %p128
      %p130 = scmp.ne.s32.totalorder %s118, %s119
      %p131 = scmp.eq.s32.totalorder %s25, 7
      %p132 = por %p130, %p131
      %p134 = scmp.ne.s32.totalorder %s119, %s133
      %p135 = scmp.eq.s32.totalorder %s25, 0
      %p136 = por %p134, %p135
      %s138 = sadd.s32 %s137, 1
      %p141 = scmp.eq.s32.totalorder %s19, 7
      %p142 = scmp.ne.s32.totalorder %s137, %s139
      %p143 = scmp.eq.s32.totalorder %s19, 0
      %p144 = por %p142, %p143
      %p145 = scmp.ne.s32.totalorder %s137, %s139
      %p146 = scmp.eq.s32.totalorder %s24, 7
      %p147 = por %p145, %p146
      %p148 = scmp.ne.s32.totalorder %s139, %s140
      %p149 = scmp.eq.s32.totalorder %s24, 0
      %p150 = por %p148, %p149
      %p151 = scmp.ne.s32.totalorder %s139, %s140
      %p152 = scmp.eq.s32.totalorder %s25, 7
      %p153 = por %p151, %p152
      %p155 = scmp.ne.s32.totalorder %s140, %s154
      %p156 = scmp.eq.s32.totalorder %s25, 0
      %p157 = por %p155, %p156
      %s159 = sadd.s32 %s158, 1
      %p162 = scmp.eq.s32.totalorder %s19, 7
      %p163 = scmp.ne.s32.totalorder %s158, %s160
      %p164 = scmp.eq.s32.totalorder %s19, 0
      %p165 = por %p163, %p164
      %p166 = scmp.ne.s32.totalorder %s158, %s160
      %p167 = scmp.eq.s32.totalorder %s24, 7
      %p168 = por %p166, %p167
      %p169 = scmp.ne.s32.totalorder %s160, %s161
      %p170 = scmp.eq.s32.totalorder %s24, 0
      %p171 = por %p169, %p170
      %p172 = scmp.ne.s32.totalorder %s160, %s161
      %p173 = scmp.eq.s32.totalorder %s25, 7
      %p174 = por %p172, %p173
      %p176 = scmp.ne.s32.totalorder %s161, %s175
      %p177 = scmp.eq.s32.totalorder %s25, 0
      %p178 = por %p176, %p177
      %s180 = sadd.s32 %s179, 1
      %p183 = scmp.eq.s32.totalorder %s19, 7
      %p184 = scmp.ne.s32.totalorder %s179, %s181
      %p185 = scmp.eq.s32.totalorder %s19, 0
      %p186 = por %p184, %p185
      %p187 = scmp.ne.s32.totalorder %s179, %s181
      %p188 = scmp.eq.s32.totalorder %s24, 7
      %p189 = por %p187, %p188
      %p190 = scmp.ne.s32.totalorder %s181, %s182
      %p191 = scmp.eq.s32.totalorder %s24, 0
      %p192 = por %p190, %p191
      %p193 = scmp.ne.s32.totalorder %s181, %s182
      %p194 = scmp.eq.s32.totalorder %s25, 7
      %p195 = por %p193, %p194
      %p197 = scmp.ne.s32.totalorder %s182, %s196
      %p198 = scmp.eq.s32.totalorder %s25, 0
      %p199 = por %p197, %p198
      %s201 = sadd.s32 %s200, 1
      %p204 = scmp.eq.s32.totalorder %s19, 7
      %p205 = scmp.ne.s32.totalorder %s200, %s202
      %p206 = scmp.eq.s32.totalorder %s19, 0
      %p207 = por %p205, %p206
      %p208 = scmp.ne.s32.totalorder %s200, %s202
      %p209 = scmp.eq.s32.totalorder %s24, 7
      %p210 = por %p208, %p209
      %p211 = scmp.ne.s32.totalorder %s202, %s203
      %p212 = scmp.eq.s32.totalorder %s24, 0
      %p213 = por %p211, %p212
      %p214 = scmp.ne.s32.totalorder %s202, %s203
      %p215 = scmp.eq.s32.totalorder %s25, 7
      %p216 = por %p214, %p215
      %p218 = scmp.ne.s32.totalorder %s203, %s217
      %p219 = scmp.eq.s32.totalorder %s25, 0
      %p220 = por %p218, %p219
      %s222 = sadd.s32 %s221, 1
      %p225 = scmp.eq.s32.totalorder %s19, 7
      %p226 = scmp.ne.s32.totalorder %s221, %s223
      %p227 = scmp.eq.s32.totalorder %s19, 0
      %p228 = por %p226, %p227
      %p229 = scmp.ne.s32.totalorder %s221, %s223
      %p230 = scmp.eq.s32.totalorder %s24, 7
      %p231 = por %p229, %p230
      %p232 = scmp.ne.s32.totalorder %s223, %s224
      %p233 = scmp.eq.s32.totalorder %s24, 0
      %p234 = por %p232, %p233
      %p235 = scmp.ne.s32.totalorder %s223, %s224
      %p236 = scmp.eq.s32.totalorder %s25, 7
      %p237 = por %p235, %p236
      %p239 = scmp.ne.s32.totalorder %s224, %s238
      %p240 = scmp.eq.s32.totalorder %s25, 0
      %p241 = por %p239, %p240
      %s243 = sadd.s32 %s242, 1
      %p246 = scmp.eq.s32.totalorder %s19, 7
      %p247 = scmp.ne.s32.totalorder %s242, %s244
      %p248 = scmp.eq.s32.totalorder %s19, 0
      %p249 = por %p247, %p248
      %p250 = scmp.ne.s32.totalorder %s242, %s244
      %p251 = scmp.eq.s32.totalorder %s24, 7
      %p252 = por %p250, %p251
      %p253 = scmp.ne.s32.totalorder %s244, %s245
      %p254 = scmp.eq.s32.totalorder %s24, 0
      %p255 = por %p253, %p254
      %p256 = scmp.ne.s32.totalorder %s244, %s245
      %p257 = scmp.eq.s32.totalorder %s25, 7
      %p258 = por %p256, %p257
      %p260 = scmp.ne.s32.totalorder %s245, %s259
      %p261 = scmp.eq.s32.totalorder %s25, 0
      %p262 = por %p260, %p261
      %s263 = ssub.s32 %s26, %s38
      %s264 = ssub.s32 %s27, %s34
      %s265 = sor.u32 %s263, %s264
      %p266 = scmp.eq.s32.totalorder %s265, 0
      %s268 = sadd.s32 %s267, 1
      %s269 = scalar_select %p266, %s267, %s268
      %p272 = pneg %p266
      %p273 = scmp.eq.s32.totalorder %s19, 7
      %p274 = por %p272, %p273
      %p275 = scmp.ne.s32.totalorder %s267, %s270
      %p276 = scmp.eq.s32.totalorder %s19, 0
      %p277 = por %p275, %p276
      %p278 = scmp.ne.s32.totalorder %s267, %s270
      %p279 = scmp.eq.s32.totalorder %s24, 7
      %p280 = por %p278, %p279
      %p281 = scmp.ne.s32.totalorder %s270, %s271
      %p282 = scmp.eq.s32.totalorder %s24, 0
      %p283 = por %p281, %p282
      %p284 = scmp.ne.s32.totalorder %s270, %s271
      %p285 = scmp.eq.s32.totalorder %s25, 7
      %p286 = por %p284, %p285
      %p288 = scmp.ne.s32.totalorder %s271, %s287
      %p289 = scmp.eq.s32.totalorder %s25, 0
      %p290 = por %p288, %p289
      %p291 = scmp.le.s32.totalorder 1, %s19
      %p292 = scmp.lt.s32.totalorder %s19, 9
      %p293 = pnand %p291, %p292
      %p294 = pneg %p293
      // Predicated region
      $region9: #{tpu_custom_call.1} parent=5 // pred_check
        _
      $region10: #{tpu_custom_call.1} parent=5 // pred_check_branch
        %296 = sbr.rel (%p293) target = $region12
      $region11: #{tpu_custom_call.1} parent=5 // pred_region
        %s297 = ssub.s32 %s19, 1
        // Predicated region
        $region13: #{tpu_custom_call.1} parent=11 // pred_check
          %p298 = pneg %p108
        $region14: #{tpu_custom_call.1} parent=11 // pred_check_branch
          %300 = sbr.rel (%p298) target = $region16
        $region15: #{tpu_custom_call.1} parent=11 // pred_region
          _
        $region16: #{tpu_custom_call.1} parent=11 // pred_fallthru
          _
        // Predicated region
        $region17: #{tpu_custom_call.1} parent=11 // pred_check
          %p301 = pneg %p129
        $region18: #{tpu_custom_call.1} parent=11 // pred_check_branch
          %303 = sbr.rel (%p301) target = $region20
        $region19: #{tpu_custom_call.1} parent=11 // pred_region
          _
        $region20: #{tpu_custom_call.1} parent=11 // pred_fallthru
          _
        // Predicated region
        $region21: #{tpu_custom_call.1} parent=11 // pred_check
          %p304 = pneg %p150
        $region22: #{tpu_custom_call.1} parent=11 // pred_check_branch
          %306 = sbr.rel (%p304) target = $region24
        $region23: #{tpu_custom_call.1} parent=11 // pred_region
          _
        $region24: #{tpu_custom_call.1} parent=11 // pred_fallthru
          _
        // Predicated region
        $region25: #{tpu_custom_call.1} parent=11 // pred_check
          %p307 = pneg %p171
        $region26: #{tpu_custom_call.1} parent=11 // pred_check_branch
          %309 = sbr.rel (%p307) target = $region28
        $region27: #{tpu_custom_call.1} parent=11 // pred_region
          _
        $region28: #{tpu_custom_call.1} parent=11 // pred_fallthru
          _
        // Predicated region
        $region29: #{tpu_custom_call.1} parent=11 // pred_check
          %p310 = pneg %p192
        $region30: #{tpu_custom_call.1} parent=11 // pred_check_branch
          %312 = sbr.rel (%p310) target = $region32
        $region31: #{tpu_custom_call.1} parent=11 // pred_region
          _
        $region32: #{tpu_custom_call.1} parent=11 // pred_fallthru
          _
        // Predicated region
        $region33: #{tpu_custom_call.1} parent=11 // pred_check
          %p313 = pneg %p213
        $region34: #{tpu_custom_call.1} parent=11 // pred_check_branch
          %315 = sbr.rel (%p313) target = $region36
        $region35: #{tpu_custom_call.1} parent=11 // pred_region
          _
        $region36: #{tpu_custom_call.1} parent=11 // pred_fallthru
          _
        // Predicated region
        $region37: #{tpu_custom_call.1} parent=11 // pred_check
          %p316 = pneg %p234
        $region38: #{tpu_custom_call.1} parent=11 // pred_check_branch
          %318 = sbr.rel (%p316) target = $region40
        $region39: #{tpu_custom_call.1} parent=11 // pred_region
          _
        $region40: #{tpu_custom_call.1} parent=11 // pred_fallthru
          _
        // Predicated region
        $region41: #{tpu_custom_call.1} parent=11 // pred_check
          %p319 = pneg %p255
        $region42: #{tpu_custom_call.1} parent=11 // pred_check_branch
          %321 = sbr.rel (%p319) target = $region44
        $region43: #{tpu_custom_call.1} parent=11 // pred_region
          _
        $region44: #{tpu_custom_call.1} parent=11 // pred_fallthru
          _
      $region12: #{tpu_custom_call.1} parent=5 // pred_fallthru
        _
      %p322 = scmp.lt.s32.totalorder %s19, 8
      // Predicated region
      $region45: #{tpu_custom_call.1} parent=5 // pred_check
        %p323 = pneg %p322
      $region46: #{tpu_custom_call.1} parent=5 // pred_check_branch
        %325 = sbr.rel (%p323) target = $region48
      $region47: #{tpu_custom_call.1} parent=5 // pred_region
        // Predicated region
        $region49: #{tpu_custom_call.1} parent=47 // pred_check
          %p326 = pneg %p53
        $region50: #{tpu_custom_call.1} parent=47 // pred_check_branch
          %328 = sbr.rel (%p326) target = $region52
        $region51: #{tpu_custom_call.1} parent=47 // pred_region
          %s329 = smul.u32 8, %s27
          %p330 = scmp.lt.s32.totalorder %s26, 1
          %s331 = scalar_select %p330, %s26, 1
          %p332 = scmp.lt.s32.totalorder %s329, 31
          %s333 = scalar_select %p332, %s329, 31
          %s334 = smul.addr %s331, 32
          %s335 = sadd.s32 %s333, %s334
          %s336 = smul.addr %s335, 4
          %s337 = scalar_lea.vmem %s0, %s336
          %s338 = smul.u32 8, %s27
        $region52: #{tpu_custom_call.1} parent=47 // pred_fallthru
          _
        // Predicated region
        $region53: #{tpu_custom_call.1} parent=47 // pred_check
          %p339 = pneg %p81
        $region54: #{tpu_custom_call.1} parent=47 // pred_check_branch
          %341 = sbr.rel (%p339) target = $region56
        $region55: #{tpu_custom_call.1} parent=47 // pred_region
          %p342 = scmp.lt.s32.totalorder %s26, 1
          %s343 = scalar_select %p342, %s26, 1
          %p344 = scmp.lt.s32.totalorder %s27, 3
          %s345 = scalar_select %p344, %s27, 3
          %s346 = smul.addr %s345, 4
          %s347 = smul.addr %s343, 16
          %s348 = sadd.s32 %s346, %s347
          %s349 = smul.addr %s348, 4
          %s350 = scalar_lea.vmem %s1, %s349
        $region56: #{tpu_custom_call.1} parent=47 // pred_fallthru
          _
      $region48: #{tpu_custom_call.1} parent=5 // pred_fallthru
        _
      %p351 = scmp.le.s32.totalorder 1, %s19
      %p352 = scmp.lt.s32.totalorder %s19, 9
      %p353 = pnand %p351, %p352
      %p354 = pneg %p353
      // Predicated region
      $region57: #{tpu_custom_call.1} parent=5 // pred_check
        _
      $region58: #{tpu_custom_call.1} parent=5 // pred_check_branch
        %356 = sbr.rel (%p353) target = $region60
      $region59: #{tpu_custom_call.1} parent=5 // pred_region
        %s357 = ssub.s32 %s19, 1
        %s358 = smul.u32 8, %s29
        %p359 = scmp.lt.s32.totalorder %s28, 1
        %s360 = scalar_select %p359, %s28, 1
        %p361 = scmp.lt.s32.totalorder %s358, 31
        %s362 = scalar_select %p361, %s358, 31
        %s363 = smul.addr %s360, 32
        %s364 = sadd.s32 %s362, %s363
        %s365 = smul.addr %s364, 4
        %s366 = scalar_lea.vmem %s0, %s365
        %p367 = pneg %p59
        %p368 = pneg %p56
        %p369 = scmp.lt.s32.totalorder %s28, 1
        %s370 = scalar_select %p369, %s28, 1
        %p371 = scmp.lt.s32.totalorder %s29, 3
        %s372 = scalar_select %p371, %s29, 3
        %s373 = smul.addr %s372, 4
        %s374 = smul.addr %s370, 16
        %s375 = sadd.s32 %s373, %s374
        %s376 = smul.addr %s375, 4
        %s377 = scalar_lea.vmem %s1, %s376
        %p378 = pneg %p87
        %p379 = pneg %p84
        %p380 = pneg %p108
        %p381 = pneg %p105
        %p382 = pneg %p129
        %p383 = pneg %p126
        %p384 = pneg %p150
        %p385 = pneg %p147
        %p386 = pneg %p171
        %p387 = pneg %p168
        %p388 = pneg %p192
        %p389 = pneg %p189
        %p390 = pneg %p213
        %p391 = pneg %p210
        %p392 = pneg %p234
        %p393 = pneg %p231
        %p394 = pneg %p255
        %p395 = pneg %p252
        %p396 = pneg %p283
        %p397 = pneg %p280
        %s398 = sand.u32 %s270, 1
        %s399 = scalar_lea.sflag [#allocation4], %s398
        %s400 = sand.u32 %s270, 1
        %s401 = smul.addr %s400, 32
        %s402 = scalar_lea.vmem [#allocation3], %s401
        %s403 = smul.u32 8, %s29
        %p404 = scmp.lt.s32.totalorder %s28, 1
        %s405 = scalar_select %p404, %s28, 1
        %p406 = scmp.lt.s32.totalorder %s403, 31
        %s407 = scalar_select %p406, %s403, 31
        %s408 = smul.addr %s405, 32
        %s409 = sadd.s32 %s407, %s408
        %s410 = smul.addr %s409, 4
        %s411 = scalar_lea.vmem %s0, %s410
        %s412 = smul.u32 8, %s29
        %p413 = scmp.lt.s32.totalorder %s28, 1
        %s414 = scalar_select %p413, %s28, 1
        %p415 = scmp.lt.s32.totalorder %s29, 3
        %s416 = scalar_select %p415, %s29, 3
        %s417 = smul.addr %s416, 4
        %s418 = smul.addr %s414, 16
        %s419 = sadd.s32 %s417, %s418
        %s420 = smul.addr %s419, 4
        %s421 = scalar_lea.vmem %s1, %s420
        %s422 = smul.u32 8, %s29
        %v424 = vld [vmem:[%s421] sm:$0xf]
        %v425 = vld [vmem:[%s421 + $0x4] sm:$0xf]
        %v426 = vld [vmem:[%s421 + $0x8] sm:$0xf]
        %v427 = vld [vmem:[%s421 + $0xc] sm:$0xf]
        %v428 = vld [vmem:[%s411] sm:$0xf]
        %v429 = vld [vmem:[%s411 + $0x4] sm:$0xf]
        %v430 = vld [vmem:[%s411 + $0x8] sm:$0xf]
        %v431 = vld [vmem:[%s411 + $0xc] sm:$0xf]
        %v432 = vld [vmem:[%s411 + $0x10] sm:$0xf]
        %v433 = vld [vmem:[%s411 + $0x14] sm:$0xf]
        %v434 = vld [vmem:[%s411 + $0x18] sm:$0xf]
        %v435 = vld [vmem:[%s411 + $0x1c] sm:$0xf]
        %v438 = vunpack.c.l.b16 %v424
        %v439 = vunpack.c.l.b16 %v425
        %v440 = vpack.c.b16 %v439, %v438
        %v450 = vunpack.c.l.b16 %v428
        %v451 = vunpack.c.l.b16 %v429
        %v452 = vunpack.c.l.b16 %v430
        %v453 = vunpack.c.l.b16 %v431
        %v454 = vunpack.c.l.b16 %v432
        %v455 = vunpack.c.l.b16 %v433
        %v456 = vunpack.c.l.b16 %v434
        %v457 = vunpack.c.l.b16 %v435
        %v458 = vpack.c.b16 %v451, %v450
        %v459 = vpack.c.b16 %v453, %v452
        %v460 = vpack.c.b16 %v455, %v454
        %v461 = vpack.c.b16 %v457, %v456
        %v468 = vunpack.c.l.b16 %v426
        %v469 = vunpack.c.l.b16 %v427
        %v470 = vpack.c.b16 %v469, %v468
        %v472 = vld [vmem:[%s2] sm:$0xf]
        %v473 = vld [vmem:[%s2 + $0x4] sm:$0xf]
        %v474 = vld [vmem:[%s2 + $0x8] sm:$0xf]
        %v475 = vld [vmem:[%s2 + $0xc] sm:$0xf]
        %v476 = vld [vmem:[%s2 + $0x10] sm:$0xf]
        %v477 = vld [vmem:[%s2 + $0x14] sm:$0xf]
        %v478 = vld [vmem:[%s2 + $0x18] sm:$0xf]
        %v479 = vld [vmem:[%s2 + $0x1c] sm:$0xf]
        %v480 = vld [vmem:[%s2 + $0x20] sm:$0xf]
        %v481 = vld [vmem:[%s2 + $0x24] sm:$0xf]
        %v482 = vld [vmem:[%s2 + $0x28] sm:$0xf]
        %v483 = vld [vmem:[%s2 + $0x2c] sm:$0xf]
        %v484 = vld [vmem:[%s2 + $0x30] sm:$0xf]
        %v485 = vld [vmem:[%s2 + $0x34] sm:$0xf]
        %v486 = vld [vmem:[%s2 + $0x38] sm:$0xf]
        %v487 = vld [vmem:[%s2 + $0x3c] sm:$0xf]
        %v488 = vld [vmem:[%s5] sm:$0x1]
        %v490 = vlaneseq
        %v491 = vshrl.u32 %v490, 7
        %v492 = vsub.s32 0, %v491
        %v493 = vrot.slane %v488, %v492
        %v511 = vunpack.c.l.b16 %v472
        %v512 = vunpack.c.l.b16 %v473
        %v513 = vunpack.c.l.b16 %v474
        %v514 = vunpack.c.l.b16 %v475
        %v515 = vunpack.c.l.b16 %v476
        %v516 = vunpack.c.l.b16 %v477
        %v517 = vunpack.c.l.b16 %v478
        %v518 = vunpack.c.l.b16 %v479
        %v519 = vunpack.c.l.b16 %v480
        %v520 = vunpack.c.l.b16 %v481
        %v521 = vunpack.c.l.b16 %v482
        %v522 = vunpack.c.l.b16 %v483
        %v523 = vunpack.c.l.b16 %v484
        %v524 = vunpack.c.l.b16 %v485
        %v525 = vunpack.c.l.b16 %v486
        %v526 = vunpack.c.l.b16 %v487
        %v527 = vpack.c.b16 %v512, %v511
        %v528 = vpack.c.b16 %v514, %v513
        %v529 = vpack.c.b16 %v516, %v515
        %v530 = vpack.c.b16 %v518, %v517
        %v531 = vpack.c.b16 %v520, %v519
        %v532 = vpack.c.b16 %v522, %v521
        %v533 = vpack.c.b16 %v524, %v523
        %v534 = vpack.c.b16 %v526, %v525
        %543 = vmatprep.subr.bf16.mxu0 0
        %544 = vmatpush1.bf16.msra.mxu0 %v527
        %545 = vmatprep.subr.bf16.mxu0 0
        %546 = vmatpush1.bf16.msra.mxu0 %v528
        %547 = vmatprep.subr.bf16.mxu0 0
        %548 = vmatpush1.bf16.msra.mxu0 %v529
        %549 = vmatprep.subr.bf16.mxu0 0
        %550 = vmatpush1.bf16.msra.mxu0 %v530
        %551 = vmatprep.subr.bf16.mxu0 0
        %552 = vmatpush1.bf16.msra.mxu0 %v531
        %553 = vmatprep.subr.bf16.mxu0 0
        %554 = vmatpush1.bf16.msra.mxu0 %v532
        %555 = vmatprep.subr.bf16.mxu0 0
        %556 = vmatpush1.bf16.msra.mxu0 %v533
        %557 = vmatprep.subr.bf16.mxu0 0
        %558 = vmatpush1.bf16.msra.mxu0 %v534
        %559 = vmatprep.subr.bf16.mxu0 0
        %560 = vmatpush1.bf16.msra.mxu0 0
        %561 = vmatprep.subr.bf16.mxu0 0
        %562 = vmatpush1.bf16.msra.mxu0 0
        %563 = vmatprep.subr.bf16.mxu0 0
        %564 = vmatpush1.bf16.msra.mxu0 0
        %565 = vmatprep.subr.bf16.mxu0 0
        %566 = vmatpush1.bf16.msra.mxu0 0
        %567 = vmatprep.subr.bf16.mxu0 0
        %568 = vmatpush1.bf16.msra.mxu0 0
        %569 = vmatprep.subr.bf16.mxu0 0
        %570 = vmatpush1.bf16.msra.mxu0 0
        %571 = vmatprep.subr.bf16.mxu0 0
        %572 = vmatpush1.bf16.msra.mxu0 0
        %573 = vmatprep.subr.bf16.mxu0 0
        %574 = vmatpush1.bf16.msra.mxu0 0
        %575 = vmatprep.mubr.bf16.mxu0 0
        %576 = vmatmul.mubr.bf16.gmra.mrb[0].mxu0 %v440
        %v577 = vpop.f32.mrb[0].mxu0
        %v578 = vadd.f32 %v493, %v577
        %v579 = vpop.f32.mrb[0].mxu0
        %v580 = vpop.f32.mrb[0].mxu0
        %v581 = vadd.f32 %v493, %v580
        %v582 = vpop.f32.mrb[0].mxu0
        %583 = vmatprep.mubr.bf16.mxu0 0
        %584 = vmatmul.mubr.bf16.gmra.mrb[0].mxu0 %v458
        %v585 = vpop.f32.mrb[0].mxu0
        %v586 = vadd.f32 %v493, %v585
        %v587 = vpop.f32.mrb[0].mxu0
        %v588 = vpop.f32.mrb[0].mxu0
        %v589 = vadd.f32 %v493, %v588
        %v590 = vpop.f32.mrb[0].mxu0
        %591 = vmatprep.mubr.bf16.mxu0 0
        %592 = vmatmul.mubr.bf16.gmra.mrb[0].mxu0 %v459
        %v593 = vpop.f32.mrb[0].mxu0
        %v594 = vadd.f32 %v493, %v593
        %v595 = vpop.f32.mrb[0].mxu0
        %v596 = vpop.f32.mrb[0].mxu0
        %v597 = vadd.f32 %v493, %v596
        %v598 = vpop.f32.mrb[0].mxu0
        %599 = vmatprep.mubr.bf16.mxu0 0
        %600 = vmatmul.mubr.bf16.gmra.mrb[0].mxu0 %v460
        %v601 = vpop.f32.mrb[0].mxu0
        %v602 = vadd.f32 %v493, %v601
        %v603 = vpop.f32.mrb[0].mxu0
        %v604 = vpop.f32.mrb[0].mxu0
        %v605 = vadd.f32 %v493, %v604
        %v606 = vpop.f32.mrb[0].mxu0
        %607 = vmatprep.mubr.bf16.mxu0 0
        %608 = vmatmul.mubr.bf16.gmra.mrb[0].mxu0 %v461
        %v609 = vpop.f32.mrb[0].mxu0
        %v610 = vadd.f32 %v493, %v609
        %v611 = vpop.f32.mrb[0].mxu0
        %v612 = vpop.f32.mrb[0].mxu0
        %v613 = vadd.f32 %v493, %v612
        %v614 = vpop.f32.mrb[0].mxu0
        %615 = vmatprep.mubr.bf16.mxu0 0
        %616 = vmatmul.mubr.bf16.gmra.mrb[0].mxu0 %v470
        %v617 = vpop.f32.mrb[0].mxu0
        %v618 = vadd.f32 %v493, %v617
        %v619 = vpop.f32.mrb[0].mxu0
        %v620 = vpop.f32.mrb[0].mxu0
        %v621 = vadd.f32 %v493, %v620
        %v622 = vpop.f32.mrb[0].mxu0
        %623 = vdwg.mxu0
        %v624 = vmax.f32 %v578, 0.0
        %v625 = vmax.f32 %v581, 0.0
        %v626 = vmax.f32 %v586, 0.0
        %v627 = vmax.f32 %v589, 0.0
        %v628 = vmax.f32 %v594, 0.0
        %v629 = vmax.f32 %v597, 0.0
        %v630 = vmax.f32 %v602, 0.0
        %v631 = vmax.f32 %v605, 0.0
        %v632 = vmax.f32 %v610, 0.0
        %v633 = vmax.f32 %v613, 0.0
        %v634 = vmax.f32 %v618, 0.0
        %v635 = vmax.f32 %v621, 0.0
        %v636 = vlaneseq
        %v637 = vshrl.u32 %v636, 7
        %v638 = vadd.s32 %v637, 8
        %v639 = vadd.s32 %v637, 16
        %v640 = vadd.s32 %v637, 24
        %v641 = vadd.s32 %v637, 32
        %v642 = vadd.s32 %v637, 40
        %v643 = vadd.s32 %v637, 48
        %v644 = vadd.s32 %v637, 56
        %v645 = vadd.s32 %v637, 64
        %v646 = vadd.s32 %v637, 72
        %v647 = vadd.s32 %v637, 80
        %v648 = vadd.s32 %v637, 88
        %vm649 = vcmp.ge.s32.totalorder %v637, 16
        %vm650 = vcmp.ge.s32.totalorder %v638, 16
        %vm651 = vcmp.ge.s32.totalorder %v639, 16
        %vm652 = vcmp.ge.s32.totalorder %v640, 16
        %vm653 = vcmp.ge.s32.totalorder %v641, 16
        %vm654 = vcmp.ge.s32.totalorder %v642, 16
        %vm655 = vcmp.ge.s32.totalorder %v643, 16
        %vm656 = vcmp.ge.s32.totalorder %v644, 16
        %vm657 = vcmp.ge.s32.totalorder %v645, 16
        %vm658 = vcmp.ge.s32.totalorder %v646, 16
        %vm659 = vcmp.ge.s32.totalorder %v647, 16
        %vm660 = vcmp.ge.s32.totalorder %v648, 16
        %p661 = scmp.gt.s32.totalorder %s29, 0
        %s662 = scalar_select %p661, 1, 0
        %v663 = vstv %s662
        %vm664 = vcmp.eq.s32.totalorder %v663, 1
        %vm665 = vmor %vm649, %vm664
        %vm666 = vmor %vm650, %vm664
        %vm667 = vmor %vm651, %vm664
        %vm668 = vmor %vm652, %vm664
        %vm669 = vmor %vm653, %vm664
        %vm670 = vmor %vm654, %vm664
        %vm671 = vmor %vm655, %vm664
        %vm672 = vmor %vm656, %vm664
        %vm673 = vmor %vm657, %vm664
        %vm674 = vmor %vm658, %vm664
        %vm675 = vmor %vm659, %vm664
        %vm676 = vmor %vm660, %vm664
        %vm677 = vcmp.lt.s32.totalorder %v637, 80
        %vm678 = vcmp.lt.s32.totalorder %v638, 80
        %vm679 = vcmp.lt.s32.totalorder %v639, 80
        %vm680 = vcmp.lt.s32.totalorder %v640, 80
        %vm681 = vcmp.lt.s32.totalorder %v641, 80
        %vm682 = vcmp.lt.s32.totalorder %v642, 80
        %vm683 = vcmp.lt.s32.totalorder %v643, 80
        %vm684 = vcmp.lt.s32.totalorder %v644, 80
        %vm685 = vcmp.lt.s32.totalorder %v645, 80
        %vm686 = vcmp.lt.s32.totalorder %v646, 80
        %vm687 = vcmp.lt.s32.totalorder %v647, 80
        %vm688 = vcmp.lt.s32.totalorder %v648, 80
        %p689 = scmp.lt.s32.totalorder %s29, 3
        %s690 = scalar_select %p689, 1, 0
        %v691 = vstv %s690
        %vm692 = vcmp.eq.s32.totalorder %v691, 1
        %vm693 = vmor %vm677, %vm692
        %vm694 = vmor %vm678, %vm692
        %vm695 = vmor %vm679, %vm692
        %vm696 = vmor %vm680, %vm692
        %vm697 = vmor %vm681, %vm692
        %vm698 = vmor %vm682, %vm692
        %vm699 = vmor %vm683, %vm692
        %vm700 = vmor %vm684, %vm692
        %vm701 = vmor %vm685, %vm692
        %vm702 = vmor %vm686, %vm692
        %vm703 = vmor %vm687, %vm692
        %vm704 = vmor %vm688, %vm692
        %vm705 = vmand %vm665, %vm693
        %vm706 = vmand %vm666, %vm694
        %vm707 = vmand %vm667, %vm695
        %vm708 = vmand %vm668, %vm696
        %vm709 = vmand %vm669, %vm697
        %vm710 = vmand %vm670, %vm698
        %vm711 = vmand %vm671, %vm699
        %vm712 = vmand %vm672, %vm700
        %vm713 = vmand %vm673, %vm701
        %vm714 = vmand %vm674, %vm702
        %vm715 = vmand %vm675, %vm703
        %vm716 = vmand %vm676, %vm704
        %v717 = vsel %vm705, 1, 0
        %v718 = vsel %vm706, 1, 0
        %v719 = vsel %vm707, 1, 0
        %v720 = vsel %vm708, 1, 0
        %v721 = vsel %vm709, 1, 0
        %v722 = vsel %vm710, 1, 0
        %v723 = vsel %vm711, 1, 0
        %v724 = vsel %vm712, 1, 0
        %v725 = vsel %vm713, 1, 0
        %v726 = vsel %vm714, 1, 0
        %v727 = vsel %vm715, 1, 0
        %v728 = vsel %vm716, 1, 0
        %vm729 = vcmp.eq.s32.totalorder %v717, 1
        %vm730 = vcmp.eq.s32.totalorder %v718, 1
        %vm731 = vcmp.eq.s32.totalorder %v719, 1
        %vm732 = vcmp.eq.s32.totalorder %v720, 1
        %vm733 = vcmp.eq.s32.totalorder %v721, 1
        %vm734 = vcmp.eq.s32.totalorder %v722, 1
        %vm735 = vcmp.eq.s32.totalorder %v723, 1
        %vm736 = vcmp.eq.s32.totalorder %v724, 1
        %vm737 = vcmp.eq.s32.totalorder %v725, 1
        %vm738 = vcmp.eq.s32.totalorder %v726, 1
        %vm739 = vcmp.eq.s32.totalorder %v727, 1
        %vm740 = vcmp.eq.s32.totalorder %v728, 1
        %v741 = vsel %vm729, %v624, 0.0
        %v742 = vsel %vm730, %v625, 0.0
        %v743 = vsel %vm731, %v626, 0.0
        %v744 = vsel %vm732, %v627, 0.0
        %v745 = vsel %vm733, %v628, 0.0
        %v746 = vsel %vm734, %v629, 0.0
        %v747 = vsel %vm735, %v630, 0.0
        %v748 = vsel %vm736, %v631, 0.0
        %v749 = vsel %vm737, %v632, 0.0
        %v750 = vsel %vm738, %v633, 0.0
        %v751 = vsel %vm739, %v634, 0.0
        %v752 = vsel %vm740, %v635, 0.0
        %v753 = vpack.c.bf16 %v742, %v741
        %v754 = vpack.c.bf16 %v744, %v743
        %v755 = vpack.c.bf16 %v746, %v745
        %v756 = vpack.c.bf16 %v748, %v747
        %v757 = vpack.c.bf16 %v750, %v749
        %v758 = vpack.c.bf16 %v752, %v751
        %765 = vrot.lane.b32.xlu0 %v753, 32
        %v766 = vpop.permute.xlu0 %765
        %767 = vrot.lane.b32.xlu0 %v754, 32
        %v768 = vpop.permute.xlu0 %767
        %769 = vrot.lane.b32.xlu0 %v755, 32
        %v770 = vpop.permute.xlu0 %769
        %771 = vrot.lane.b32.xlu0 %v756, 32
        %v772 = vpop.permute.xlu0 %771
        %773 = vrot.lane.b32.xlu0 %v757, 32
        %v774 = vpop.permute.xlu0 %773
        %775 = vrot.lane.b32.xlu0 %v758, 32
        %v776 = vpop.permute.xlu0 %775
        %vm783 = vcmask 523520
        %784 = vst.msk [vmem:[#allocation2] sm:$0xff] %vm783, %v766
        %785 = vst.msk [vmem:[#allocation2 + $0x8] sm:$0xff] %vm783, %v768
        %786 = vst.msk [vmem:[#allocation2 + $0x10] sm:$0xff] %vm783, %v770
        %787 = vst.msk [vmem:[#allocation2 + $0x18] sm:$0xff] %vm783, %v772
        %788 = vst.msk [vmem:[#allocation2 + $0x20] sm:$0xff] %vm783, %v774
        %789 = vst.msk [vmem:[#allocation2 + $0x28] sm:$0xff] %vm783, %v776
        %v790 = vld [vmem:[%s8] sm:$0xff]
        %v791 = vld [vmem:[%s8 + $0x8] sm:$0xff]
        %v792 = vld [vmem:[%s8 + $0x10] sm:$0xff]
        %v793 = vld [vmem:[%s8 + $0x18] sm:$0xff]
        %v794 = vld [vmem:[%s8 + $0x20] sm:$0xff]
        %v795 = vld [vmem:[%s8 + $0x28] sm:$0xff]
        %v796 = vld [vmem:[%s8 + $0x30] sm:$0xff]
        %v797 = vld [vmem:[%s8 + $0x38] sm:$0xff]
        %v798 = vld [vmem:[%s8 + $0x40] sm:$0xff]
        %v799 = vld [vmem:[%s8 + $0x48] sm:$0xff]
        %v800 = vld [vmem:[%s8 + $0x50] sm:$0xff]
        %v801 = vld [vmem:[%s8 + $0x58] sm:$0xff]
        %803 = vset.pattern.permute.xlu0 0
        %804 = vperm.xlu0 %803, %v790
        %v805 = vpop.permute.xlu0 %804
        %808 = vset.pattern.permute.xlu0 0
        %809 = vperm.xlu0 %808, %v791
        %v810 = vpop.permute.xlu0 %809
        %813 = vset.pattern.permute.xlu0 0
        %814 = vperm.xlu0 %813, %v792
        %v815 = vpop.permute.xlu0 %814
        %818 = vset.pattern.permute.xlu0 0
        %819 = vperm.xlu0 %818, %v793
        %v820 = vpop.permute.xlu0 %819
        %823 = vset.pattern.permute.xlu0 0
        %824 = vperm.xlu0 %823, %v794
        %v825 = vpop.permute.xlu0 %824
        %828 = vset.pattern.permute.xlu0 0
        %829 = vperm.xlu0 %828, %v795
        %v830 = vpop.permute.xlu0 %829
        %833 = vset.pattern.permute.xlu0 0
        %834 = vperm.xlu0 %833, %v796
        %v835 = vpop.permute.xlu0 %834
        %838 = vset.pattern.permute.xlu0 0
        %839 = vperm.xlu0 %838, %v797
        %v840 = vpop.permute.xlu0 %839
        %843 = vset.pattern.permute.xlu0 0
        %844 = vperm.xlu0 %843, %v798
        %v845 = vpop.permute.xlu0 %844
        %848 = vset.pattern.permute.xlu0 0
        %849 = vperm.xlu0 %848, %v799
        %v850 = vpop.permute.xlu0 %849
        %853 = vset.pattern.permute.xlu0 0
        %854 = vperm.xlu0 %853, %v800
        %v855 = vpop.permute.xlu0 %854
        %858 = vset.pattern.permute.xlu0 0
        %859 = vperm.xlu0 %858, %v801
        %v860 = vpop.permute.xlu0 %859
        %v862 = vmul.f32 %v741, %v805
        %v863 = vmul.f32 %v742, %v810
        %v864 = vmul.f32 %v743, %v815
        %v865 = vmul.f32 %v744, %v820
        %v866 = vmul.f32 %v745, %v825
        %v867 = vmul.f32 %v746, %v830
        %v868 = vmul.f32 %v747, %v835
        %v869 = vmul.f32 %v748, %v840
        %v870 = vmul.f32 %v749, %v845
        %v871 = vmul.f32 %v750, %v850
        %v872 = vmul.f32 %v751, %v855
        %v873 = vmul.f32 %v752, %v860
        %v874 = vrot.slane %v862, 7
        %v875 = vrot.slane %v863, 7
        %v876 = vrot.slane %v864, 7
        %v877 = vrot.slane %v865, 7
        %v878 = vrot.slane %v866, 7
        %v879 = vrot.slane %v867, 7
        %v880 = vrot.slane %v868, 7
        %v881 = vrot.slane %v869, 7
        %v882 = vrot.slane %v870, 7
        %v883 = vrot.slane %v871, 7
        %v884 = vrot.slane %v872, 7
        %v885 = vrot.slane %v873, 7
        %vm886 = vcmp.lt.s32.totalorder %v637, 1
        %v887 = vsel %vm886, %v884, %v885
        %v888 = vsel %vm886, %v883, %v884
        %v889 = vsel %vm886, %v882, %v883
        %v890 = vsel %vm886, %v881, %v882
        %v891 = vsel %vm886, %v880, %v881
        %v892 = vsel %vm886, %v879, %v880
        %v893 = vsel %vm886, %v878, %v879
        %v894 = vsel %vm886, %v877, %v878
        %v895 = vsel %vm886, %v876, %v877
        %v896 = vsel %vm886, %v875, %v876
        %v897 = vsel %vm886, %v874, %v875
        %v898 = vsel %vm886, %v885, %v874
        %v899 = vpack.c.bf16 %v897, %v898
        %v900 = vpack.c.bf16 %v895, %v896
        %v901 = vpack.c.bf16 %v893, %v894
        %v902 = vpack.c.bf16 %v891, %v892
        %v903 = vpack.c.bf16 %v889, %v890
        %v904 = vpack.c.bf16 %v887, %v888
        %vm905 = vcmask 261120
        %906 = vst.msk [vmem:[#allocation2] sm:$0xff] %vm905, %v899
        %907 = vst.msk [vmem:[#allocation2 + $0x8] sm:$0xff] %vm905, %v900
        %908 = vst.msk [vmem:[#allocation2 + $0x10] sm:$0xff] %vm905, %v901
        %909 = vst.msk [vmem:[#allocation2 + $0x18] sm:$0xff] %vm905, %v902
        %910 = vst.msk [vmem:[#allocation2 + $0x20] sm:$0xff] %vm905, %v903
        %911 = vst.msk [vmem:[#allocation2 + $0x28] sm:$0xff] %vm905, %v904
        %v912 = vld [vmem:[%s9] sm:$0xff]
        %v913 = vld [vmem:[%s9 + $0x8] sm:$0xff]
        %v914 = vld [vmem:[%s9 + $0x10] sm:$0xff]
        %v915 = vld [vmem:[%s9 + $0x18] sm:$0xff]
        %v916 = vld [vmem:[%s9 + $0x20] sm:$0xff]
        %v917 = vld [vmem:[%s9 + $0x28] sm:$0xff]
        %v918 = vld [vmem:[%s9 + $0x30] sm:$0xff]
        %v919 = vld [vmem:[%s9 + $0x38] sm:$0xff]
        %v920 = vld [vmem:[%s9 + $0x40] sm:$0xff]
        %v921 = vld [vmem:[%s9 + $0x48] sm:$0xff]
        %v922 = vld [vmem:[%s9 + $0x50] sm:$0xff]
        %v923 = vld [vmem:[%s9 + $0x58] sm:$0xff]
        %925 = vset.pattern.permute.xlu0 0
        %926 = vperm.xlu0 %925, %v912
        %v927 = vpop.permute.xlu0 %926
        %930 = vset.pattern.permute.xlu0 0
        %931 = vperm.xlu0 %930, %v913
        %v932 = vpop.permute.xlu0 %931
        %935 = vset.pattern.permute.xlu0 0
        %936 = vperm.xlu0 %935, %v914
        %v937 = vpop.permute.xlu0 %936
        %940 = vset.pattern.permute.xlu0 0
        %941 = vperm.xlu0 %940, %v915
        %v942 = vpop.permute.xlu0 %941
        %945 = vset.pattern.permute.xlu0 0
        %946 = vperm.xlu0 %945, %v916
        %v947 = vpop.permute.xlu0 %946
        %950 = vset.pattern.permute.xlu0 0
        %951 = vperm.xlu0 %950, %v917
        %v952 = vpop.permute.xlu0 %951
        %955 = vset.pattern.permute.xlu0 0
        %956 = vperm.xlu0 %955, %v918
        %v957 = vpop.permute.xlu0 %956
        %960 = vset.pattern.permute.xlu0 0
        %961 = vperm.xlu0 %960, %v919
        %v962 = vpop.permute.xlu0 %961
        %965 = vset.pattern.permute.xlu0 0
        %966 = vperm.xlu0 %965, %v920
        %v967 = vpop.permute.xlu0 %966
        %970 = vset.pattern.permute.xlu0 0
        %971 = vperm.xlu0 %970, %v921
        %v972 = vpop.permute.xlu0 %971
        %975 = vset.pattern.permute.xlu0 0
        %976 = vperm.xlu0 %975, %v922
        %v977 = vpop.permute.xlu0 %976
        %980 = vset.pattern.permute.xlu0 0
        %981 = vperm.xlu0 %980, %v923
        %v982 = vpop.permute.xlu0 %981
        %v984 = vmul.f32 %v741, %v927
        %v985 = vmul.f32 %v742, %v932
        %v986 = vmul.f32 %v743, %v937
        %v987 = vmul.f32 %v744, %v942
        %v988 = vmul.f32 %v745, %v947
        %v989 = vmul.f32 %v746, %v952
        %v990 = vmul.f32 %v747, %v957
        %v991 = vmul.f32 %v748, %v962
        %v992 = vmul.f32 %v749, %v967
        %v993 = vmul.f32 %v750, %v972
        %v994 = vmul.f32 %v751, %v977
        %v995 = vmul.f32 %v752, %v982
        %v996 = vrot.slane %v984, 1
        %v997 = vrot.slane %v985, 1
        %v998 = vrot.slane %v986, 1
        %v999 = vrot.slane %v987, 1
        %v1000 = vrot.slane %v988, 1
        %v1001 = vrot.slane %v989, 1
        %v1002 = vrot.slane %v990, 1
        %v1003 = vrot.slane %v991, 1
        %v1004 = vrot.slane %v992, 1
        %v1005 = vrot.slane %v993, 1
        %v1006 = vrot.slane %v994, 1
        %v1007 = vrot.slane %v995, 1
        %vm1008 = vcmp.lt.s32.totalorder %v637, 7
        %v1009 = vsel %vm1008, %v1006, %v1007
        %v1010 = vsel %vm1008, %v1005, %v1006
        %v1011 = vsel %vm1008, %v1004, %v1005
        %v1012 = vsel %vm1008, %v1003, %v1004
        %v1013 = vsel %vm1008, %v1002, %v1003
        %v1014 = vsel %vm1008, %v1001, %v1002
        %v1015 = vsel %vm1008, %v1000, %v1001
        %v1016 = vsel %vm1008, %v999, %v1000
        %v1017 = vsel %vm1008, %v998, %v999
        %v1018 = vsel %vm1008, %v997, %v998
        %v1019 = vsel %vm1008, %v996, %v997
        %v1020 = vsel %vm1008, %v1007, %v996
        %v1021 = vpack.c.bf16 %v1018, %v1019
        %v1022 = vpack.c.bf16 %v1016, %v1017
        %v1023 = vpack.c.bf16 %v1014, %v1015
        %v1024 = vpack.c.bf16 %v1012, %v1013
        %v1025 = vpack.c.bf16 %v1010, %v1011
        %v1026 = vpack.c.bf16 %v1020, %v1009
        %1033 = vrot.lane.b32.xlu0 %v1021, 64
        %v1034 = vpop.permute.xlu0 %1033
        %1035 = vrot.lane.b32.xlu0 %v1022, 64
        %v1036 = vpop.permute.xlu0 %1035
        %1037 = vrot.lane.b32.xlu0 %v1023, 64
        %v1038 = vpop.permute.xlu0 %1037
        %1039 = vrot.lane.b32.xlu0 %v1024, 64
        %v1040 = vpop.permute.xlu0 %1039
        %1041 = vrot.lane.b32.xlu0 %v1025, 64
        %v1042 = vpop.permute.xlu0 %1041
        %1043 = vrot.lane.b32.xlu0 %v1026, 64
        %v1044 = vpop.permute.xlu0 %1043
        %vm1051 = vcmask 785920
        %1052 = vst.msk [vmem:[#allocation2] sm:$0xff] %vm1051, %v1034
        %1053 = vst.msk [vmem:[#allocation2 + $0x8] sm:$0xff] %vm1051, %v1036
        %1054 = vst.msk [vmem:[#allocation2 + $0x10] sm:$0xff] %vm1051, %v1038
        %1055 = vst.msk [vmem:[#allocation2 + $0x18] sm:$0xff] %vm1051, %v1040
        %1056 = vst.msk [vmem:[#allocation2 + $0x20] sm:$0xff] %vm1051, %v1042
        %1057 = vst.msk [vmem:[#allocation2 + $0x28] sm:$0xff] %vm1051, %v1044
        %v1058 = vld [vmem:[#allocation2] sm:$0xff]
        %v1059 = vld [vmem:[#allocation2 + $0x8] sm:$0xff]
        %v1060 = vld [vmem:[#allocation2 + $0x10] sm:$0xff]
        %v1061 = vld [vmem:[#allocation2 + $0x18] sm:$0xff]
        %v1062 = vld [vmem:[%s3] sm:$0xf]
        %v1063 = vld [vmem:[%s3 + $0x4] sm:$0xf]
        %v1064 = vld [vmem:[%s3 + $0x8] sm:$0xf]
        %v1065 = vld [vmem:[%s3 + $0xc] sm:$0xf]
        %v1066 = vld [vmem:[%s3 + $0x10] sm:$0xf]
        %v1067 = vld [vmem:[%s3 + $0x14] sm:$0xf]
        %v1068 = vld [vmem:[%s3 + $0x18] sm:$0xf]
        %v1069 = vld [vmem:[%s3 + $0x1c] sm:$0xf]
        %v1070 = vld [vmem:[%s3 + $0x20] sm:$0xf]
        %v1071 = vld [vmem:[%s3 + $0x24] sm:$0xf]
        %v1072 = vld [vmem:[%s3 + $0x28] sm:$0xf]
        %v1073 = vld [vmem:[%s3 + $0x2c] sm:$0xf]
        %v1074 = vld [vmem:[#allocation2 + $0x20] sm:$0xff]
        %s1075 = scalar_lea.vmem %s3, 48
        %v1076 = vld [vmem:[%s1075] sm:$0xf]
        %v1077 = vld [vmem:[%s1075 + $0x4] sm:$0xf]
        %v1078 = vld [vmem:[%s1075 + $0x8] sm:$0xf]
        %v1079 = vld [vmem:[%s1075 + $0xc] sm:$0xf]
        %v1080 = vld [vmem:[%s1075 + $0x10] sm:$0xf]
        %v1081 = vld [vmem:[%s1075 + $0x14] sm:$0xf]
        %v1082 = vld [vmem:[%s1075 + $0x18] sm:$0xf]
        %v1083 = vld [vmem:[%s1075 + $0x1c] sm:$0xf]
        %v1084 = vld [vmem:[%s1075 + $0x20] sm:$0xf]
        %v1085 = vld [vmem:[%s1075 + $0x24] sm:$0xf]
        %v1086 = vld [vmem:[%s1075 + $0x28] sm:$0xf]
        %v1087 = vld [vmem:[%s1075 + $0x2c] sm:$0xf]
        %v1100 = vunpack.c.l.b16 %v1076
        %v1101 = vunpack.c.l.b16 %v1077
        %v1102 = vunpack.c.l.b16 %v1078
        %v1103 = vunpack.c.l.b16 %v1079
        %v1104 = vunpack.c.l.b16 %v1080
        %v1105 = vunpack.c.l.b16 %v1081
        %v1106 = vunpack.c.l.b16 %v1082
        %v1107 = vunpack.c.l.b16 %v1083
        %v1108 = vunpack.c.l.b16 %v1084
        %v1109 = vunpack.c.l.b16 %v1085
        %v1110 = vunpack.c.l.b16 %v1086
        %v1111 = vunpack.c.l.b16 %v1087
        %v1112 = vpack.c.b16 %v1101, %v1100
        %v1113 = vpack.c.b16 %v1103, %v1102
        %v1114 = vpack.c.b16 %v1105, %v1104
        %v1115 = vpack.c.b16 %v1107, %v1106
        %v1116 = vpack.c.b16 %v1109, %v1108
        %v1117 = vpack.c.b16 %v1111, %v1110
        %vm1124 = vcmask 785408
        %v1126 = vsel %vm1124, %v1059, 0
        %v1129 = vsel %vm1124, %v1060, 0
        %v1132 = vsel %vm1124, %v1061, 0
        %v1135 = vsel %vm1124, %v1074, 0
        %1137 = vmatprep.subr.bf16.mxu0 0
        %1138 = vmatpush1.bf16.msra.mxu0 %v1112
        %1139 = vmatprep.subr.bf16.mxu0 0
        %1140 = vmatpush1.bf16.msra.mxu0 %v1113
        %1141 = vmatprep.subr.bf16.mxu0 0
        %1142 = vmatpush1.bf16.msra.mxu0 %v1114
        %1143 = vmatprep.subr.bf16.mxu0 0
        %1144 = vmatpush1.bf16.msra.mxu0 %v1115
        %1145 = vmatprep.subr.bf16.mxu0 0
        %1146 = vmatpush1.bf16.msra.mxu0 %v1116
        %1147 = vmatprep.subr.bf16.mxu0 0
        %1148 = vmatpush1.bf16.msra.mxu0 %v1117
        %1149 = vmatprep.subr.bf16.mxu0 0
        %1150 = vmatpush1.bf16.msra.mxu0 0
        %1151 = vmatprep.subr.bf16.mxu0 0
        %1152 = vmatpush1.bf16.msra.mxu0 0
        %1153 = vmatprep.subr.bf16.mxu0 0
        %1154 = vmatpush1.bf16.msra.mxu0 0
        %1155 = vmatprep.subr.bf16.mxu0 0
        %1156 = vmatpush1.bf16.msra.mxu0 0
        %1157 = vmatprep.subr.bf16.mxu0 0
        %1158 = vmatpush1.bf16.msra.mxu0 0
        %1159 = vmatprep.subr.bf16.mxu0 0
        %1160 = vmatpush1.bf16.msra.mxu0 0
        %1161 = vmatprep.subr.bf16.mxu0 0
        %1162 = vmatpush1.bf16.msra.mxu0 0
        %1163 = vmatprep.subr.bf16.mxu0 0
        %1164 = vmatpush1.bf16.msra.mxu0 0
        %1165 = vmatprep.subr.bf16.mxu0 0
        %1166 = vmatpush1.bf16.msra.mxu0 0
        %1167 = vmatprep.subr.bf16.mxu0 0
        %1168 = vmatpush1.bf16.msra.mxu0 0
        %1169 = vmatprep.mubr.bf16.mxu0 0
        %1170 = vmatmul.mubr.bf16.gmra.mrb[0].mxu0 %v1126
        %v1171 = vpop.f32.mrb[0].mxu0
        %v1172 = vadd.f32 0.0, %v1171
        %v1173 = vpop.f32.mrb[0].mxu0
        %v1174 = vpop.f32.mrb[0].mxu0
        %v1175 = vadd.f32 0.0, %v1174
        %v1176 = vpop.f32.mrb[0].mxu0
        %1177 = vmatprep.mubr.bf16.mxu0 0
        %1178 = vmatmul.mubr.bf16.gmra.mrb[0].mxu0 %v1129
        %v1179 = vpop.f32.mrb[0].mxu0
        %v1180 = vadd.f32 0.0, %v1179
        %v1181 = vpop.f32.mrb[0].mxu0
        %v1182 = vpop.f32.mrb[0].mxu0
        %v1183 = vadd.f32 0.0, %v1182
        %v1184 = vpop.f32.mrb[0].mxu0
        %1185 = vmatprep.mubr.bf16.mxu0 0
        %1186 = vmatmul.mubr.bf16.gmra.mrb[0].mxu0 %v1132
        %v1187 = vpop.f32.mrb[0].mxu0
        %v1188 = vadd.f32 0.0, %v1187
        %v1189 = vpop.f32.mrb[0].mxu0
        %v1190 = vpop.f32.mrb[0].mxu0
        %v1191 = vadd.f32 0.0, %v1190
        %v1192 = vpop.f32.mrb[0].mxu0
        %1193 = vmatprep.mubr.bf16.mxu0 0
        %1194 = vmatmul.mubr.bf16.gmra.mrb[0].mxu0 %v1135
        %v1195 = vpop.f32.mrb[0].mxu0
        %v1196 = vadd.f32 0.0, %v1195
        %v1197 = vpop.f32.mrb[0].mxu0
        %v1198 = vpop.f32.mrb[0].mxu0
        %v1199 = vadd.f32 0.0, %v1198
        %v1200 = vpop.f32.mrb[0].mxu0
        %1201 = vdwg.mxu0
        %v1214 = vunpack.c.l.b16 %v1062
        %v1215 = vunpack.c.l.b16 %v1063
        %v1216 = vunpack.c.l.b16 %v1064
        %v1217 = vunpack.c.l.b16 %v1065
        %v1218 = vunpack.c.l.b16 %v1066
        %v1219 = vunpack.c.l.b16 %v1067
        %v1220 = vunpack.c.l.b16 %v1068
        %v1221 = vunpack.c.l.b16 %v1069
        %v1222 = vunpack.c.l.b16 %v1070
        %v1223 = vunpack.c.l.b16 %v1071
        %v1224 = vunpack.c.l.b16 %v1072
        %v1225 = vunpack.c.l.b16 %v1073
        %v1226 = vpack.c.b16 %v1215, %v1214
        %v1227 = vpack.c.b16 %v1217, %v1216
        %v1228 = vpack.c.b16 %v1219, %v1218
        %v1229 = vpack.c.b16 %v1221, %v1220
        %v1230 = vpack.c.b16 %v1223, %v1222
        %v1231 = vpack.c.b16 %v1225, %v1224
        %v1239 = vsel %vm1124, %v1058, 0
        %1241 = vmatprep.subr.bf16.mxu0 0
        %1242 = vmatpush1.bf16.msra.mxu0 %v1226
        %1243 = vmatprep.subr.bf16.mxu0 0
        %1244 = vmatpush1.bf16.msra.mxu0 %v1227
        %1245 = vmatprep.subr.bf16.mxu0 0
        %1246 = vmatpush1.bf16.msra.mxu0 %v1228
        %1247 = vmatprep.subr.bf16.mxu0 0
        %1248 = vmatpush1.bf16.msra.mxu0 %v1229
        %1249 = vmatprep.subr.bf16.mxu0 0
        %1250 = vmatpush1.bf16.msra.mxu0 %v1230
        %1251 = vmatprep.subr.bf16.mxu0 0
        %1252 = vmatpush1.bf16.msra.mxu0 %v1231
        %1253 = vmatprep.subr.bf16.mxu0 0
        %1254 = vmatpush1.bf16.msra.mxu0 0
        %1255 = vmatprep.subr.bf16.mxu0 0
        %1256 = vmatpush1.bf16.msra.mxu0 0
        %1257 = vmatprep.subr.bf16.mxu0 0
        %1258 = vmatpush1.bf16.msra.mxu0 0
        %1259 = vmatprep.subr.bf16.mxu0 0
        %1260 = vmatpush1.bf16.msra.mxu0 0
        %1261 = vmatprep.subr.bf16.mxu0 0
        %1262 = vmatpush1.bf16.msra.mxu0 0
        %1263 = vmatprep.subr.bf16.mxu0 0
        %1264 = vmatpush1.bf16.msra.mxu0 0
        %1265 = vmatprep.subr.bf16.mxu0 0
        %1266 = vmatpush1.bf16.msra.mxu0 0
        %1267 = vmatprep.subr.bf16.mxu0 0
        %1268 = vmatpush1.bf16.msra.mxu0 0
        %1269 = vmatprep.subr.bf16.mxu0 0
        %1270 = vmatpush1.bf16.msra.mxu0 0
        %1271 = vmatprep.subr.bf16.mxu0 0
        %1272 = vmatpush1.bf16.msra.mxu0 0
        %1273 = vmatprep.mubr.bf16.mxu0 0
        %1274 = vmatmul.mubr.bf16.gmra.mrb[0].mxu0 %v1239
        %v1275 = vpop.f32.mrb[0].mxu0
        %v1276 = vadd.f32 %v1172, %v1275
        %v1277 = vpop.f32.mrb[0].mxu0
        %v1278 = vpop.f32.mrb[0].mxu0
        %v1279 = vadd.f32 %v1175, %v1278
        %v1280 = vpop.f32.mrb[0].mxu0
        %1281 = vmatprep.mubr.bf16.mxu0 0
        %1282 = vmatmul.mubr.bf16.gmra.mrb[0].mxu0 %v1126
        %v1283 = vpop.f32.mrb[0].mxu0
        %v1284 = vadd.f32 %v1180, %v1283
        %v1285 = vpop.f32.mrb[0].mxu0
        %v1286 = vpop.f32.mrb[0].mxu0
        %v1287 = vadd.f32 %v1183, %v1286
        %v1288 = vpop.f32.mrb[0].mxu0
        %1289 = vmatprep.mubr.bf16.mxu0 0
        %1290 = vmatmul.mubr.bf16.gmra.mrb[0].mxu0 %v1129
        %v1291 = vpop.f32.mrb[0].mxu0
        %v1292 = vadd.f32 %v1188, %v1291
        %v1293 = vpop.f32.mrb[0].mxu0
        %v1294 = vpop.f32.mrb[0].mxu0
        %v1295 = vadd.f32 %v1191, %v1294
        %v1296 = vpop.f32.mrb[0].mxu0
        %1297 = vmatprep.mubr.bf16.mxu0 0
        %1298 = vmatmul.mubr.bf16.gmra.mrb[0].mxu0 %v1132
        %v1299 = vpop.f32.mrb[0].mxu0
        %v1300 = vadd.f32 %v1196, %v1299
        %v1301 = vpop.f32.mrb[0].mxu0
        %v1302 = vpop.f32.mrb[0].mxu0
        %v1303 = vadd.f32 %v1199, %v1302
        %v1304 = vpop.f32.mrb[0].mxu0
        %1305 = vdwg.mxu0
        %v1306 = vld [vmem:[#allocation2 + $0x10] sm:$0xff]
        %v1307 = vld [vmem:[#allocation2 + $0x18] sm:$0xff]
        %v1308 = vld [vmem:[#allocation2 + $0x20] sm:$0xff]
        %v1309 = vld [vmem:[#allocation2 + $0x28] sm:$0xff]
        %s1310 = scalar_lea.vmem %s3, 96
        %v1311 = vld [vmem:[%s1310] sm:$0xf]
        %v1312 = vld [vmem:[%s1310 + $0x4] sm:$0xf]
        %v1313 = vld [vmem:[%s1310 + $0x8] sm:$0xf]
        %v1314 = vld [vmem:[%s1310 + $0xc] sm:$0xf]
        %v1315 = vld [vmem:[%s1310 + $0x10] sm:$0xf]
        %v1316 = vld [vmem:[%s1310 + $0x14] sm:$0xf]
        %v1317 = vld [vmem:[%s1310 + $0x18] sm:$0xf]
        %v1318 = vld [vmem:[%s1310 + $0x1c] sm:$0xf]
        %v1319 = vld [vmem:[%s1310 + $0x20] sm:$0xf]
        %v1320 = vld [vmem:[%s1310 + $0x24] sm:$0xf]
        %v1321 = vld [vmem:[%s1310 + $0x28] sm:$0xf]
        %v1322 = vld [vmem:[%s1310 + $0x2c] sm:$0xf]
        %v1335 = vunpack.c.l.b16 %v1311
        %v1336 = vunpack.c.l.b16 %v1312
        %v1337 = vunpack.c.l.b16 %v1313
        %v1338 = vunpack.c.l.b16 %v1314
        %v1339 = vunpack.c.l.b16 %v1315
        %v1340 = vunpack.c.l.b16 %v1316
        %v1341 = vunpack.c.l.b16 %v1317
        %v1342 = vunpack.c.l.b16 %v1318
        %v1343 = vunpack.c.l.b16 %v1319
        %v1344 = vunpack.c.l.b16 %v1320
        %v1345 = vunpack.c.l.b16 %v1321
        %v1346 = vunpack.c.l.b16 %v1322
        %v1347 = vpack.c.b16 %v1336, %v1335
        %v1348 = vpack.c.b16 %v1338, %v1337
        %v1349 = vpack.c.b16 %v1340, %v1339
        %v1350 = vpack.c.b16 %v1342, %v1341
        %v1351 = vpack.c.b16 %v1344, %v1343
        %v1352 = vpack.c.b16 %v1346, %v1345
        %v1360 = vsel %vm1124, %v1306, 0
        %v1363 = vsel %vm1124, %v1307, 0
        %v1366 = vsel %vm1124, %v1308, 0
        %v1369 = vsel %vm1124, %v1309, 0
        %1371 = vmatprep.subr.bf16.mxu0 0
        %1372 = vmatpush1.bf16.msra.mxu0 %v1347
        %1373 = vmatprep.subr.bf16.mxu0 0
        %1374 = vmatpush1.bf16.msra.mxu0 %v1348
        %1375 = vmatprep.subr.bf16.mxu0 0
        %1376 = vmatpush1.bf16.msra.mxu0 %v1349
        %1377 = vmatprep.subr.bf16.mxu0 0
        %1378 = vmatpush1.bf16.msra.mxu0 %v1350
        %1379 = vmatprep.subr.bf16.mxu0 0
        %1380 = vmatpush1.bf16.msra.mxu0 %v1351
        %1381 = vmatprep.subr.bf16.mxu0 0
        %1382 = vmatpush1.bf16.msra.mxu0 %v1352
        %1383 = vmatprep.subr.bf16.mxu0 0
        %1384 = vmatpush1.bf16.msra.mxu0 0
        %1385 = vmatprep.subr.bf16.mxu0 0
        %1386 = vmatpush1.bf16.msra.mxu0 0
        %1387 = vmatprep.subr.bf16.mxu0 0
        %1388 = vmatpush1.bf16.msra.mxu0 0
        %1389 = vmatprep.subr.bf16.mxu0 0
        %1390 = vmatpush1.bf16.msra.mxu0 0
        %1391 = vmatprep.subr.bf16.mxu0 0
        %1392 = vmatpush1.bf16.msra.mxu0 0
        %1393 = vmatprep.subr.bf16.mxu0 0
        %1394 = vmatpush1.bf16.msra.mxu0 0
        %1395 = vmatprep.subr.bf16.mxu0 0
        %1396 = vmatpush1.bf16.msra.mxu0 0
        %1397 = vmatprep.subr.bf16.mxu0 0
        %1398 = vmatpush1.bf16.msra.mxu0 0
        %1399 = vmatprep.subr.bf16.mxu0 0
        %1400 = vmatpush1.bf16.msra.mxu0 0
        %1401 = vmatprep.subr.bf16.mxu0 0
        %1402 = vmatpush1.bf16.msra.mxu0 0
        %1403 = vmatprep.mubr.bf16.mxu0 0
        %1404 = vmatmul.mubr.bf16.gmra.mrb[0].mxu0 %v1360
        %v1405 = vpop.f32.mrb[0].mxu0
        %v1406 = vadd.f32 0.0, %v1405
        %v1407 = vpop.f32.mrb[0].mxu0
        %v1408 = vpop.f32.mrb[0].mxu0
        %v1409 = vadd.f32 0.0, %v1408
        %v1410 = vpop.f32.mrb[0].mxu0
        %1411 = vmatprep.mubr.bf16.mxu0 0
        %1412 = vmatmul.mubr.bf16.gmra.mrb[0].mxu0 %v1363
        %v1413 = vpop.f32.mrb[0].mxu0
        %v1414 = vadd.f32 0.0, %v1413
        %v1415 = vpop.f32.mrb[0].mxu0
        %v1416 = vpop.f32.mrb[0].mxu0
        %v1417 = vadd.f32 0.0, %v1416
        %v1418 = vpop.f32.mrb[0].mxu0
        %1419 = vmatprep.mubr.bf16.mxu0 0
        %1420 = vmatmul.mubr.bf16.gmra.mrb[0].mxu0 %v1366
        %v1421 = vpop.f32.mrb[0].mxu0
        %v1422 = vadd.f32 0.0, %v1421
        %v1423 = vpop.f32.mrb[0].mxu0
        %v1424 = vpop.f32.mrb[0].mxu0
        %v1425 = vadd.f32 0.0, %v1424
        %v1426 = vpop.f32.mrb[0].mxu0
        %1427 = vmatprep.mubr.bf16.mxu0 0
        %1428 = vmatmul.mubr.bf16.gmra.mrb[0].mxu0 %v1369
        %v1429 = vpop.f32.mrb[0].mxu0
        %v1430 = vadd.f32 0.0, %v1429
        %v1431 = vpop.f32.mrb[0].mxu0
        %v1432 = vpop.f32.mrb[0].mxu0
        %v1433 = vadd.f32 0.0, %v1432
        %v1434 = vpop.f32.mrb[0].mxu0
        %1435 = vdwg.mxu0
        %v1436 = vadd.f32 %v1276, %v1406
        %v1437 = vadd.f32 %v1279, %v1409
        %v1438 = vadd.f32 %v1284, %v1414
        %v1439 = vadd.f32 %v1287, %v1417
        %v1440 = vadd.f32 %v1292, %v1422
        %v1441 = vadd.f32 %v1295, %v1425
        %v1442 = vadd.f32 %v1300, %v1430
        %v1443 = vadd.f32 %v1303, %v1433
        %v1444 = vld [vmem:[%s6] sm:$0x1]
        %v1446 = vlaneseq
        %v1447 = vshrl.u32 %v1446, 7
        %v1448 = vsub.s32 0, %v1447
        %v1449 = vrot.slane %v1444, %v1448
        %v1451 = vadd.f32 %v1436, %v1449
        %v1452 = vadd.f32 %v1437, %v1449
        %v1453 = vadd.f32 %v1438, %v1449
        %v1454 = vadd.f32 %v1439, %v1449
        %v1455 = vadd.f32 %v1440, %v1449
        %v1456 = vadd.f32 %v1441, %v1449
        %v1457 = vadd.f32 %v1442, %v1449
        %v1458 = vadd.f32 %v1443, %v1449
        %v1459 = vmax.f32 %v1451, 0.0
        %v1460 = vmax.f32 %v1452, 0.0
        %v1461 = vmax.f32 %v1453, 0.0
        %v1462 = vmax.f32 %v1454, 0.0
        %v1463 = vmax.f32 %v1455, 0.0
        %v1464 = vmax.f32 %v1456, 0.0
        %v1465 = vmax.f32 %v1457, 0.0
        %v1466 = vmax.f32 %v1458, 0.0
        %v1467 = vpack.c.bf16 %v1460, %v1459
        %v1468 = vpack.c.bf16 %v1462, %v1461
        %v1469 = vpack.c.bf16 %v1464, %v1463
        %v1470 = vpack.c.bf16 %v1466, %v1465
        %v1471 = vld [vmem:[%s4] sm:$0xf]
        %v1472 = vld [vmem:[%s4 + $0x4] sm:$0xf]
        %v1473 = vld [vmem:[%s4 + $0x8] sm:$0xf]
        %v1474 = vld [vmem:[%s4 + $0xc] sm:$0xf]
        %v1475 = vld [vmem:[%s7] sm:$0x1]
        %v1477 = vlaneseq
        %v1478 = vshrl.u32 %v1477, 7
        %v1479 = vsub.s32 0, %v1478
        %v1480 = vrot.slane %v1475, %v1479
        %v1486 = vunpack.c.l.b16 %v1471
        %v1487 = vunpack.c.l.b16 %v1472
        %v1488 = vunpack.c.l.b16 %v1473
        %v1489 = vunpack.c.l.b16 %v1474
        %v1490 = vpack.c.b16 %v1487, %v1486
        %v1491 = vpack.c.b16 %v1489, %v1488
        %v1495 = vsel %vm905, %v1467, 0
        %v1498 = vsel %vm905, %v1468, 0
        %v1501 = vsel %vm905, %v1469, 0
        %v1504 = vsel %vm905, %v1470, 0
        %1506 = vmatprep.subr.bf16.mxu0 0
        %1507 = vmatpush1.bf16.msra.mxu0 %v1490
        %1508 = vmatprep.subr.bf16.mxu0 0
        %1509 = vmatpush1.bf16.msra.mxu0 %v1491
        %1510 = vmatprep.subr.bf16.mxu0 0
        %1511 = vmatpush1.bf16.msra.mxu0 0
        %1512 = vmatprep.subr.bf16.mxu0 0
        %1513 = vmatpush1.bf16.msra.mxu0 0
        %1514 = vmatprep.subr.bf16.mxu0 0
        %1515 = vmatpush1.bf16.msra.mxu0 0
        %1516 = vmatprep.subr.bf16.mxu0 0
        %1517 = vmatpush1.bf16.msra.mxu0 0
        %1518 = vmatprep.subr.bf16.mxu0 0
        %1519 = vmatpush1.bf16.msra.mxu0 0
        %1520 = vmatprep.subr.bf16.mxu0 0
        %1521 = vmatpush1.bf16.msra.mxu0 0
        %1522 = vmatprep.subr.bf16.mxu0 0
        %1523 = vmatpush1.bf16.msra.mxu0 0
        %1524 = vmatprep.subr.bf16.mxu0 0
        %1525 = vmatpush1.bf16.msra.mxu0 0
        %1526 = vmatprep.subr.bf16.mxu0 0
        %1527 = vmatpush1.bf16.msra.mxu0 0
        %1528 = vmatprep.subr.bf16.mxu0 0
        %1529 = vmatpush1.bf16.msra.mxu0 0
        %1530 = vmatprep.subr.bf16.mxu0 0
        %1531 = vmatpush1.bf16.msra.mxu0 0
        %1532 = vmatprep.subr.bf16.mxu0 0
        %1533 = vmatpush1.bf16.msra.mxu0 0
        %1534 = vmatprep.subr.bf16.mxu0 0
        %1535 = vmatpush1.bf16.msra.mxu0 0
        %1536 = vmatprep.subr.bf16.mxu0 0
        %1537 = vmatpush1.bf16.msra.mxu0 0
        %1538 = vmatprep.mubr.bf16.mxu0 0
        %1539 = vmatmul.mubr.bf16.gmra.mrb[0].mxu0 %v1495
        %v1540 = vpop.f32.mrb[0].mxu0
        %v1541 = vadd.f32 %v1480, %v1540
        %v1542 = vpop.f32.mrb[0].mxu0
        %v1543 = vpop.f32.mrb[0].mxu0
        %v1544 = vadd.f32 %v1480, %v1543
        %v1545 = vpop.f32.mrb[0].mxu0
        %1546 = vmatprep.mubr.bf16.mxu0 0
        %1547 = vmatmul.mubr.bf16.gmra.mrb[0].mxu0 %v1498
        %v1548 = vpop.f32.mrb[0].mxu0
        %v1549 = vadd.f32 %v1480, %v1548
        %v1550 = vpop.f32.mrb[0].mxu0
        %v1551 = vpop.f32.mrb[0].mxu0
        %v1552 = vadd.f32 %v1480, %v1551
        %v1553 = vpop.f32.mrb[0].mxu0
        %1554 = vmatprep.mubr.bf16.mxu0 0
        %1555 = vmatmul.mubr.bf16.gmra.mrb[0].mxu0 %v1501
        %v1556 = vpop.f32.mrb[0].mxu0
        %v1557 = vadd.f32 %v1480, %v1556
        %v1558 = vpop.f32.mrb[0].mxu0
        %v1559 = vpop.f32.mrb[0].mxu0
        %v1560 = vadd.f32 %v1480, %v1559
        %v1561 = vpop.f32.mrb[0].mxu0
        %1562 = vmatprep.mubr.bf16.mxu0 0
        %1563 = vmatmul.mubr.bf16.gmra.mrb[0].mxu0 %v1504
        %v1564 = vpop.f32.mrb[0].mxu0
        %v1565 = vadd.f32 %v1480, %v1564
        %v1566 = vpop.f32.mrb[0].mxu0
        %v1567 = vpop.f32.mrb[0].mxu0
        %v1568 = vadd.f32 %v1480, %v1567
        %v1569 = vpop.f32.mrb[0].mxu0
        %1570 = vdwg.mxu0
        %v1571 = vld [vmem:[%s411] sm:$0xf]
        %v1572 = vld [vmem:[%s411 + $0x4] sm:$0xf]
        %v1573 = vld [vmem:[%s411 + $0x8] sm:$0xf]
        %v1574 = vld [vmem:[%s411 + $0xc] sm:$0xf]
        %v1575 = vld [vmem:[%s411 + $0x10] sm:$0xf]
        %v1576 = vld [vmem:[%s411 + $0x14] sm:$0xf]
        %v1577 = vld [vmem:[%s411 + $0x18] sm:$0xf]
        %v1578 = vld [vmem:[%s411 + $0x1c] sm:$0xf]
        %v1579 = vunpack.c.l.bf16 %v1571
        %v1580 = vunpack.c.l.bf16 %v1572
        %v1581 = vunpack.c.l.bf16 %v1573
        %v1582 = vunpack.c.l.bf16 %v1574
        %v1583 = vunpack.c.l.bf16 %v1575
        %v1584 = vunpack.c.l.bf16 %v1576
        %v1585 = vunpack.c.l.bf16 %v1577
        %v1586 = vunpack.c.l.bf16 %v1578
        %v1587 = vadd.f32 %v1541, %v1579
        %v1588 = vadd.f32 %v1544, %v1580
        %v1589 = vadd.f32 %v1549, %v1581
        %v1590 = vadd.f32 %v1552, %v1582
        %v1591 = vadd.f32 %v1557, %v1583
        %v1592 = vadd.f32 %v1560, %v1584
        %v1593 = vadd.f32 %v1565, %v1585
        %v1594 = vadd.f32 %v1568, %v1586
        %v1595 = vmax.f32 %v1587, 0.0
        %v1596 = vmax.f32 %v1588, 0.0
        %v1597 = vmax.f32 %v1589, 0.0
        %v1598 = vmax.f32 %v1590, 0.0
        %v1599 = vmax.f32 %v1591, 0.0
        %v1600 = vmax.f32 %v1592, 0.0
        %v1601 = vmax.f32 %v1593, 0.0
        %v1602 = vmax.f32 %v1594, 0.0
        %v1603 = vpack.c.bf16 %v1596, %v1595
        %v1604 = vpack.c.bf16 %v1598, %v1597
        %v1605 = vpack.c.bf16 %v1600, %v1599
        %v1606 = vpack.c.bf16 %v1602, %v1601
        %v1611 = vunpack.c.l.b16 %v1603
        %v1612 = vunpack.c.h.b16 %v1603
        %v1613 = vunpack.c.l.b16 %v1604
        %v1614 = vunpack.c.h.b16 %v1604
        %v1615 = vunpack.c.l.b16 %v1605
        %v1616 = vunpack.c.h.b16 %v1605
        %v1617 = vunpack.c.l.b16 %v1606
        %v1618 = vunpack.c.h.b16 %v1606
        %v1619 = vpack.c.b16 %v1611, %v1611
        %v1620 = vpack.c.b16 %v1612, %v1612
        %v1621 = vpack.c.b16 %v1613, %v1613
        %v1622 = vpack.c.b16 %v1614, %v1614
        %v1623 = vpack.c.b16 %v1615, %v1615
        %v1624 = vpack.c.b16 %v1616, %v1616
        %v1625 = vpack.c.b16 %v1617, %v1617
        %v1626 = vpack.c.b16 %v1618, %v1618
        %1635 = vst [vmem:[%s402] sm:$0xf] %v1619
        %1636 = vst [vmem:[%s402 + $0x4] sm:$0xf] %v1620
        %1637 = vst [vmem:[%s402 + $0x8] sm:$0xf] %v1621
        %1638 = vst [vmem:[%s402 + $0xc] sm:$0xf] %v1622
        %1639 = vst [vmem:[%s402 + $0x10] sm:$0xf] %v1623
        %1640 = vst [vmem:[%s402 + $0x14] sm:$0xf] %v1624
        %1641 = vst [vmem:[%s402 + $0x18] sm:$0xf] %v1625
        %1642 = vst [vmem:[%s402 + $0x1c] sm:$0xf] %v1626
        %s1643 = sand.u32 %s270, 1
        %s1644 = scalar_lea.sflag [#allocation4], %s1643
        %s1645 = sand.u32 %s270, 1
        %s1646 = smul.addr %s1645, 32
        %s1647 = scalar_lea.vmem [#allocation3], %s1646
        // Predicated region
        $region61: #{tpu_custom_call.1} parent=59 // pred_check
          %p1648 = pneg %p280
        $region62: #{tpu_custom_call.1} parent=59 // pred_check_branch
          %1650 = sbr.rel (%p1648) target = $region64
        $region63: #{tpu_custom_call.1} parent=59 // pred_region
          %s1651 = smul.u32 8, %s29
          %s1653 = ssub.s32 512, 512
          %1654 = vsyncadd %s1644, %s1653
          %s1655 = smul.addr %s28, 32
          %s1656 = sadd.s32 %s1651, %s1655
          %s1657 = smul.addr %s1656, 64
          %s1658 = scalar_lea.hbm %s10, %s1657
          %s1659 = sshll.u32 %s1647, 4
          %s1660 = int_to_ptr.vmem [resolvable:$true] %s1659
          %1665 = dma.vmem_to_hbm [thread:$0]  %s1660, 512, %s1658, %s1644, 64, 64, 4
        $region64: #{tpu_custom_call.1} parent=59 // pred_fallthru
          _
      $region60: #{tpu_custom_call.1} parent=5 // pred_fallthru
        _
      %p1666 = scmp.le.s32.totalorder 2, %s19
      // Predicated region
      $region65: #{tpu_custom_call.1} parent=5 // pred_check
        %p1667 = pneg %p1666
      $region66: #{tpu_custom_call.1} parent=5 // pred_check_branch
        %1669 = sbr.rel (%p1667) target = $region68
      $region67: #{tpu_custom_call.1} parent=5 // pred_region
        %s1670 = ssub.s32 %s19, 2
        // Predicated region
        $region69: #{tpu_custom_call.1} parent=67 // pred_check
          %p1671 = pneg %p286
        $region70: #{tpu_custom_call.1} parent=67 // pred_check_branch
          %1673 = sbr.rel (%p1671) target = $region72
        $region71: #{tpu_custom_call.1} parent=67 // pred_region
          %s1674 = sand.u32 %s271, 1
          %s1675 = scalar_lea.sflag [#allocation4], %s1674
          %s1676 = sand.u32 %s271, 1
          %s1677 = smul.addr %s1676, 32
          %s1678 = scalar_lea.vmem [#allocation3], %s1677
          %1679 = dma.done %s1675, 512
        $region72: #{tpu_custom_call.1} parent=67 // pred_fallthru
          _
      $region68: #{tpu_custom_call.1} parent=5 // pred_fallthru
        _
    $region6: #{tpu_custom_call.1} parent=1 // loop_footer
      %s23 = sadd.s32 1, %s19
    $region7: #{tpu_custom_call.1} parent=1 // loop_footer_branch
      %18 = sbr.rel target = $region3
    $region8: #{tpu_custom_call.1} parent=1 // loop_exit
      _
    %1680 = vsyncpa [#allocation4], 1
    %s1681 = scalar_lea.sflag [#allocation4], 1
    %1682 = vsyncpa %s1681, 1

</llo_original>
